<compile_context>
chip_gen: v7x
topology: tpu7x:2x2x1
jax: 0.10.0
libtpu: 0.0.40
codegen_flags: <defaults>
</compile_context>

<pallas_src>
import jax
import jax.numpy as jnp
from jax import lax
from jax.experimental import pallas as pl
from jax.experimental.pallas import tpu as pltpu

BN_EPS = 1e-5


# ----------------------------- in-kernel math -------------------------------

def _erf(x):
    # Abramowitz & Stegun 7.1.26, |err| < 1.5e-7.  exp -> EUP; the divide is
    # an EUP approx reciprocal refined with one Newton step.
    a1, a2, a3, a4, a5 = (0.254829592, -0.284496736, 1.421413741,
                          -1.453152027, 1.061405429)
    p = 0.3275911
    ax = jnp.abs(x)
    y = 1.0 + p * ax
    t = pl.reciprocal(y, approx=True)
    t = t * (2.0 - y * t)                      # Newton refinement
    poly = ((((a5 * t + a4) * t + a3) * t + a2) * t + a1) * t
    r = 1.0 - poly * jnp.exp(-ax * ax)
    return jnp.where(x >= 0, r, -r)


def _gelu(x):
    # nn.GELU() default (approximate='none'): 0.5 * x * (1 + erf(x / sqrt(2)))
    return 0.5 * x * (1.0 + _erf(x * 0.7071067811865476))


def _conv_taps(a, w_ref, lane, *, TB, C, L, K):
    """'same' 1-D conv (no bias) of a (TB, C, Lp) block.

    K per-tap batched matmuls; the tap shift uses the XLU rotate
    (pltpu.roll) + lane masks instead of padded/concatenated im2col copies.
    """
    pad = K // 2
    Lp = a.shape[-1]
    acc = jnp.zeros(a.shape, jnp.float32)
    for k in range(K):                         # K is tiny & static -> unrolled
        d = k - pad
        if d == 0:
            src = a
        else:
            src = pltpu.roll(a, shift=(-d) % Lp, axis=2)
            if d > 0:       # input column l+d only valid for l < L-d
                src = jnp.where(lane < L - d, src, 0.0)
            else:           # input column l+d only valid for l >= -d
                src = jnp.where(lane >= -d, src, 0.0)
        wk = jnp.broadcast_to(w_ref[k], (TB, C, C))          # (TB, Cout, Cin)
        acc = acc + jnp.einsum('toc,tcl->tol', wk, src,
                               preferred_element_type=jnp.float32)
    return acc


def _tile_stats(h):
    # per-channel [sum; sumsq] over (batch-tile, length), lane-dense (2, C)
    s = jnp.sum(jnp.sum(h, axis=2), axis=0, keepdims=True)          # (1, C)
    ss = jnp.sum(jnp.sum(h * h, axis=2), axis=0, keepdims=True)     # (1, C)
    return jnp.concatenate([s, ss], axis=0)                         # (2, C)


# ------------------------------- kernels ------------------------------------

def _make_pass1(TB, Cp, Lp, L, K):
    def kernel(x_ref, w_ref, h_ref, st_ref):
        lane = lax.broadcasted_iota(jnp.int32, (1, 1, Lp), 2)
        h = _conv_taps(x_ref[...], w_ref, lane, TB=TB, C=Cp, L=L, K=K)
        if Lp > L:                              # zero the padded lanes
            h = jnp.where(lane < L, h, 0.0)
        h_ref[...] = h
        st_ref[0] = _tile_stats(h)
    return kernel


def _make_pass2(TB, Cp, Lp, L, K):
    def kernel(h1_ref, w_ref, sc_ref, sh_ref, h2_ref, st_ref):
        lane = lax.broadcasted_iota(jnp.int32, (1, 1, Lp), 2)
        # BN1 (folded affine) + GELU; dropout(p=0.0) -> identity.
        a = _gelu(h1_ref[...] * sc_ref[...] + sh_ref[...])
        if Lp > L:                              # restore 'same' zero padding
            a = jnp.where(lane < L, a, 0.0)
        h = _conv_taps(a, w_ref, lane, TB=TB, C=Cp, L=L, K=K)
        if Lp > L:
            h = jnp.where(lane < L, h, 0.0)
        h2_ref[...] = h
        st_ref[0] = _tile_stats(h)
    return kernel


def _make_pass3(TB, Cp, Lp):
    def kernel(h2_ref, x_ref, sc_ref, sh_ref, o_ref):
        # BN2 (folded affine) + residual + GELU
        o_ref[...] = _gelu(h2_ref[...] * sc_ref[...] + sh_ref[...] + x_ref[...])
    return kernel


# -------------------------------- wrapper ------------------------------------

def _vmem_capacity():
    try:
        return int(pltpu.get_tpu_info().vmem_capacity_bytes)
    except Exception:
        return 64 << 20          # v7x per-TC VMEM; safe lower bound


def _vmem_estimate(TB, Cp, Lp, K):
    blk = TB * Cp * Lp * 4
    # <=3 activation blocks live per pass, each double-buffered, plus in-kernel
    # temporaries (rolled taps, accumulator, GELU temps, broadcast weights).
    return (2 * 3 * blk + 6 * blk
            + 2 * TB * Cp * Cp * 4 + 4 * K * Cp * Cp * 4 + (1 << 20))


def _pick_batch_tile(B, Cp, Lp, K, budget):
    best = 1
    for tb in range(1, B + 1):
        if B % tb:
            continue
        if _vmem_estimate(tb, Cp, Lp, K) > budget:
            continue
        if B // tb >= 2 or B == 1:      # keep >=2 grid steps for 2-TC sharding
            best = tb
    return best


def _finalize_bn(stats, gamma, beta, n):
    # stats: (num_tiles, 2, Cp) partial [sum, sumsq]; training-mode
    # BatchNorm1d (biased variance), folded with gamma/beta into an affine.
    tot = jnp.sum(stats, axis=0)                         # (2, Cp)
    mean = tot[0] / n
    var = jnp.maximum(tot[1] / n - mean * mean, 0.0)
    scale = gamma * lax.rsqrt(var + BN_EPS)
    shift = beta - mean * scale
    return scale.reshape(1, -1, 1), shift.reshape(1, -1, 1)


def residual_conv_block(x, params, *, batch_tile=None):
    """x: (B, C, L) float32 -> (B, C, L) float32 (PyTorch NCL layout)."""
    w1, b1, g1, be1, w2, b2, g2, be2 = params
    del b1, b2   # conv biases cancel exactly under training-mode BatchNorm
    B, C, L = x.shape
    K = w1.shape[-1]

    Cp = ((C + 7) // 8) * 8            # sublane-dense channels
    Lp = ((L + 127) // 128) * 128      # lane-dense length

    x32 = x.astype(jnp.float32)
    xp = x32 if (Cp, Lp) == (C, L) else jnp.pad(
        x32, ((0, 0), (0, Cp - C), (0, Lp - L)))

    def prep_w(w):                                       # (Cout,Cin,K)->(K,Cout,Cin)
        wt = jnp.transpose(w.astype(jnp.float32), (2, 0, 1))
        if Cp != C:
            wt = jnp.pad(wt, ((0, 0), (0, Cp - C), (0, Cp - C)))
        return wt

    def prep_v(v):                                       # pad gamma/beta with zeros
        v = v.astype(jnp.float32)
        return v if Cp == C else jnp.pad(v, (0, Cp - C))

    w1t, w2t = prep_w(w1), prep_w(w2)
    g1p, be1p, g2p, be2p = map(prep_v, (g1, be1, g2, be2))

    cap = _vmem_capacity()
    budget = (cap * 3) // 4            # ~48 MiB on v7x, ~96 MiB on v5e/v6e
    TB = batch_tile if batch_tile is not None else _pick_batch_tile(B, Cp, Lp, K, budget)
    assert B % TB == 0, "batch_tile must divide batch"
    nbt = B // TB
    needed = _vmem_estimate(TB, Cp, Lp, K)
    cparams = pltpu.CompilerParams(
        dimension_semantics=("parallel",),
        vmem_limit_bytes=int(min(max(needed, 32 << 20), (cap * 7) // 8)))

    act_spec = pl.BlockSpec((TB, Cp, Lp), lambda i: (i, 0, 0))
    w_spec = pl.BlockSpec((K, Cp, Cp), lambda i: (0, 0, 0))
    vec_spec = pl.BlockSpec((1, Cp, 1), lambda i: (0, 0, 0))
    st_spec = pl.BlockSpec((1, 2, Cp), lambda i: (i, 0, 0))
    act_out = jax.ShapeDtypeStruct((B, Cp, Lp), jnp.float32)
    st_out = jax.ShapeDtypeStruct((nbt, 2, Cp), jnp.float32)
    n = float(B * L)

    # ---- pass 1: conv1 + BN1 partial statistics -----------------------------
    h1, st1 = pl.pallas_call(
        _make_pass1(TB, Cp, Lp, L, K),
        grid=(nbt,),
        in_specs=[act_spec, w_spec],
        out_specs=[act_spec, st_spec],
        out_shape=[act_out, st_out],
        compiler_params=cparams,
    )(xp, w1t)
    sc1, sh1 = _finalize_bn(st1, g1p, be1p, n)

    # ---- pass 2: BN1 affine + GELU + conv2 + BN2 partial statistics ---------
    h2, st2 = pl.pallas_call(
        _make_pass2(TB, Cp, Lp, L, K),
        grid=(nbt,),
        in_specs=[act_spec, w_spec, vec_spec, vec_spec],
        out_specs=[act_spec, st_spec],
        out_shape=[act_out, st_out],
        input_output_aliases={0: 0},          # reuse h1's HBM buffer for h2
        compiler_params=cparams,
    )(h1, w2t, sc1, sh1)
    sc2, sh2 = _finalize_bn(st2, g2p, be2p, n)

    # ---- pass 3: BN2 affine + residual add + GELU ----------------------------
    out = pl.pallas_call(
        _make_pass3(TB, Cp, Lp),
        grid=(nbt,),
        in_specs=[act_spec, act_spec, vec_spec, vec_spec],
        out_specs=act_spec,
        out_shape=act_out,
        input_output_aliases={0: 0},          # reuse h2's HBM buffer for out
        compiler_params=cparams,
    )(h2, xp, sc2, sh2)

    if (Cp, Lp) != (C, L):
        out = out[:, :C, :L]
    return out


# ------------------------------- reference -----------------------------------

def _reference(x_ncl, params):
    # Pure-JAX (XLA) reference for correctness checking (biases included).
    w1, b1, g1, be1, w2, b2, g2, be2 = params
    B, C, L = x_ncl.shape
    pad = w1.shape[-1] // 2

    def conv(x, w, b):
        dn = lax.conv_dimension_numbers(x.shape, w.shape, ('NCH', 'OIH', 'NCH'))
        y = lax.conv_general_dilated(x, w, (1,), ((pad, pad),),
                                     dimension_numbers=dn)
        return y + b.reshape(1, C, 1)

    def bn(h, g, be):
        mean = jnp.mean(h, axis=(0, 2), keepdims=True)
        var = jnp.mean((h - mean) ** 2, axis=(0, 2), keepdims=True)
        return (((h - mean) / jnp.sqrt(var + BN_EPS)) * g.reshape(1, C, 1)
                + be.reshape(1, C, 1))

    gelu = lambda v: 0.5 * v * (1.0 + jax.scipy.special.erf(v / jnp.sqrt(2.0)))

    h = gelu(bn(conv(x_ncl, w1, b1), g1, be1))
    h = bn(conv(h, w2, b2), g2, be2)
    return gelu(h + x_ncl)


if __name__ == "__main__":
    B, C, L, K = 2, 4, 16, 3
    key = jax.random.PRNGKey(0)
    kx, kw1, kb1, kw2, kb2, kg1, kbe1, kg2, kbe2 = jax.random.split(key, 9)

    x = jax.random.normal(kx, (B, C, L), jnp.float32)
    bound = 1.0 / (C * K) ** 0.5   # PyTorch Conv1d default init scale
    w1 = jax.random.uniform(kw1, (C, C, K), jnp.float32, -bound, bound)
    b1 = jax.random.uniform(kb1, (C,), jnp.float32, -bound, bound)
    w2 = jax.random.uniform(kw2, (C, C, K), jnp.float32, -bound, bound)
    b2 = jax.random.uniform(kb2, (C,), jnp.float32, -bound, bound)
    g1 = jax.random.uniform(kg1, (C,), jnp.float32, 0.5, 1.5)
    be1 = jax.random.uniform(kbe1, (C,), jnp.float32, -0.5, 0.5)
    g2 = jax.random.uniform(kg2, (C,), jnp.float32, 0.5, 1.5)
    be2 = jax.random.uniform(kbe2, (C,), jnp.float32, -0.5, 0.5)
    params = (w1, b1, g1, be1, w2, b2, g2, be2)

    out = jax.block_until_ready(jax.jit(residual_conv_block)(x, params))

    ref = _reference(x, params)
    assert out.shape == (B, C, L)
    err = float(jnp.max(jnp.abs(out - ref)))
    assert jnp.allclose(out, ref, rtol=1e-4, atol=1e-4), err
    print("KERNEL_OK")
</pallas_src>

<mosaic_0001>
module attributes {stable_mosaic.version = 11 : i64} {
  func.func @kernel(%arg0: i32, %arg1: memref<1x8x128xf32, #tpu.memory_space<vmem>>, %arg2: memref<3x8x8xf32, #tpu.memory_space<vmem>>, %arg3: memref<1x8x128xf32, #tpu.memory_space<vmem>>, %arg4: memref<1x2x8xf32, #tpu.memory_space<vmem>>) attributes {dimension_semantics = [#tpu.dimension_semantics<parallel>], iteration_bounds = array<i64: 2>, scalar_prefetch = 0 : i64, scratch_operands = 0 : i64, tpu.core_type = #tpu.core_type<tc>, window_params = [{transform_indices = @transform_0, window_bounds = array<i64: 1, 8, 128>}, {pipeline_mode = #tpu.pipeline_mode<synchronous>, transform_indices = @transform_1, window_bounds = array<i64: 3, 8, 8>}, {transform_indices = @transform_2, window_bounds = array<i64: 1, 8, 128>}, {transform_indices = @transform_3, window_bounds = array<i64: 1, 2, 8>}]} {
    %0 = tpu.iota {dimensions = array<i32: 2>} : vector<1x1x128xi32>
    %c0 = arith.constant 0 : index
    %c0_0 = arith.constant 0 : index
    %c0_1 = arith.constant 0 : index
    %1 = vector.load %arg1[%c0, %c0_0, %c0_1] : memref<1x8x128xf32, #tpu.memory_space<vmem>>, vector<1x8x128xf32>
    %cst = arith.constant 0.000000e+00 : f32
    %2 = vector.broadcast %cst : f32 to vector<1x8x128xf32>
    %c1_i32 = arith.constant 1 : i32
    %3 = tpu.dynamic_rotate %1 by %c1_i32 dim 2 : vector<1x8x128xf32>, i32 -> vector<1x8x128xf32>
    %c1_i32_2 = arith.constant 1 : i32
    %4 = vector.broadcast %c1_i32_2 : i32 to vector<1x1x128xi32>
    %5 = arith.cmpi sge, %0, %4 : vector<1x1x128xi32>
    %cst_3 = arith.constant 0.000000e+00 : f32
    %6 = vector.shape_cast %5 : vector<1x1x128xi1> to vector<1x1x128xi1>
    %7 = vector.broadcast %6 : vector<1x1x128xi1> to vector<1x8x128xi1>
    %8 = vector.broadcast %cst_3 : f32 to vector<1x8x128xf32>
    %9 = arith.select %7, %3, %8 : vector<1x8x128xi1>, vector<1x8x128xf32>
    %c0_4 = arith.constant 0 : index
    %c0_5 = arith.constant 0 : index
    %c0_6 = arith.constant 0 : index
    %10 = vector.load %arg2[%c0_4, %c0_5, %c0_6] : memref<3x8x8xf32, #tpu.memory_space<vmem>>, vector<1x8x8xf32>
    %11 = vector.shape_cast %10 : vector<1x8x8xf32> to vector<8x8xf32>
    %12 = vector.shape_cast %11 : vector<8x8xf32> to vector<1x8x8xf32>
    "tpu.trace_start"() <{level = 10 : i32, message = "toc,tcl->tol"}> : () -> ()
    %cst_7 = arith.constant dense<0.000000e+00> : vector<1x8x128xf32>
    %13 = tpu.matmul %12, %9, %cst_7 {dimension_numbers = #tpu.dot_dimension_numbers<[2], [1], [1], [2], [0, 0, 0, 1, 1, 2], [0], [0]>} : vector<1x8x8xf32>, vector<1x8x128xf32>, vector<1x8x128xf32> -> vector<1x8x128xf32>
    "tpu.trace_stop"() : () -> ()
    %14 = arith.addf %2, %13 : vector<1x8x128xf32>
    %c1 = arith.constant 1 : index
    %c0_8 = arith.constant 0 : index
    %c0_9 = arith.constant 0 : index
    %15 = vector.load %arg2[%c1, %c0_8, %c0_9] : memref<3x8x8xf32, #tpu.memory_space<vmem>>, vector<1x8x8xf32>
    %16 = vector.shape_cast %15 : vector<1x8x8xf32> to vector<8x8xf32>
    %17 = vector.shape_cast %16 : vector<8x8xf32> to vector<1x8x8xf32>
    "tpu.trace_start"() <{level = 10 : i32, message = "toc,tcl->tol"}> : () -> ()
    %cst_10 = arith.constant dense<0.000000e+00> : vector<1x8x128xf32>
    %18 = tpu.matmul %17, %1, %cst_10 {dimension_numbers = #tpu.dot_dimension_numbers<[2], [1], [1], [2], [0, 0, 0, 1, 1, 2], [0], [0]>} : vector<1x8x8xf32>, vector<1x8x128xf32>, vector<1x8x128xf32> -> vector<1x8x128xf32>
    "tpu.trace_stop"() : () -> ()
    %19 = arith.addf %14, %18 : vector<1x8x128xf32>
    %c127_i32 = arith.constant 127 : i32
    %20 = tpu.dynamic_rotate %1 by %c127_i32 dim 2 : vector<1x8x128xf32>, i32 -> vector<1x8x128xf32>
    %c15_i32 = arith.constant 15 : i32
    %21 = vector.broadcast %c15_i32 : i32 to vector<1x1x128xi32>
    %22 = arith.cmpi slt, %0, %21 : vector<1x1x128xi32>
    %cst_11 = arith.constant 0.000000e+00 : f32
    %23 = vector.shape_cast %22 : vector<1x1x128xi1> to vector<1x1x128xi1>
    %24 = vector.broadcast %23 : vector<1x1x128xi1> to vector<1x8x128xi1>
    %25 = vector.broadcast %cst_11 : f32 to vector<1x8x128xf32>
    %26 = arith.select %24, %20, %25 : vector<1x8x128xi1>, vector<1x8x128xf32>
    %c2 = arith.constant 2 : index
    %c0_12 = arith.constant 0 : index
    %c0_13 = arith.constant 0 : index
    %27 = vector.load %arg2[%c2, %c0_12, %c0_13] : memref<3x8x8xf32, #tpu.memory_space<vmem>>, vector<1x8x8xf32>
    %28 = vector.shape_cast %27 : vector<1x8x8xf32> to vector<8x8xf32>
    %29 = vector.shape_cast %28 : vector<8x8xf32> to vector<1x8x8xf32>
    "tpu.trace_start"() <{level = 10 : i32, message = "toc,tcl->tol"}> : () -> ()
    %cst_14 = arith.constant dense<0.000000e+00> : vector<1x8x128xf32>
    %30 = tpu.matmul %29, %26, %cst_14 {dimension_numbers = #tpu.dot_dimension_numbers<[2], [1], [1], [2], [0, 0, 0, 1, 1, 2], [0], [0]>} : vector<1x8x8xf32>, vector<1x8x128xf32>, vector<1x8x128xf32> -> vector<1x8x128xf32>
    "tpu.trace_stop"() : () -> ()
    %31 = arith.addf %19, %30 : vector<1x8x128xf32>
    %c16_i32 = arith.constant 16 : i32
    %32 = vector.broadcast %c16_i32 : i32 to vector<1x1x128xi32>
    %33 = arith.cmpi slt, %0, %32 : vector<1x1x128xi32>
    %cst_15 = arith.constant 0.000000e+00 : f32
    %34 = vector.shape_cast %33 : vector<1x1x128xi1> to vector<1x1x128xi1>
    %35 = vector.broadcast %34 : vector<1x1x128xi1> to vector<1x8x128xi1>
    %36 = vector.broadcast %cst_15 : f32 to vector<1x8x128xf32>
    %37 = arith.select %35, %31, %36 : vector<1x8x128xi1>, vector<1x8x128xf32>
    %c0_16 = arith.constant 0 : index
    %c0_17 = arith.constant 0 : index
    %c0_18 = arith.constant 0 : index
    %38 = vector.load %arg3[%c0_16, %c0_17, %c0_18] : memref<1x8x128xf32, #tpu.memory_space<vmem>>, vector<1x8x128xf32>
    tpu.vector_store %arg3[%c0_16, %c0_17, %c0_18], %37 {strides = array<i32>} : memref<1x8x128xf32, #tpu.memory_space<vmem>>, vector<1x8x128xf32>,
    %cst_19 = arith.constant dense<0.000000e+00> : vector<1x8xf32>
    %39 = vector.multi_reduction <add>, %37, %cst_19 [2] : vector<1x8x128xf32> to vector<1x8xf32>
    %cst_20 = arith.constant dense<0.000000e+00> : vector<8xf32>
    %40 = vector.multi_reduction <add>, %39, %cst_20 [0] : vector<1x8xf32> to vector<8xf32>
    %41 = vector.shape_cast %40 : vector<8xf32> to vector<1x8xf32>
    %42 = arith.mulf %37, %37 : vector<1x8x128xf32>
    %cst_21 = arith.constant dense<0.000000e+00> : vector<1x8xf32>
    %43 = vector.multi_reduction <add>, %42, %cst_21 [2] : vector<1x8x128xf32> to vector<1x8xf32>
    %cst_22 = arith.constant dense<0.000000e+00> : vector<8xf32>
    %44 = vector.multi_reduction <add>, %43, %cst_22 [0] : vector<1x8xf32> to vector<8xf32>
    %45 = vector.shape_cast %44 : vector<8xf32> to vector<1x8xf32>
    %46 = tpu.concatenate %41, %45 in 0 : vector<1x8xf32>, vector<1x8xf32> -> vector<2x8xf32>
    %c0_23 = arith.constant 0 : index
    %c0_24 = arith.constant 0 : index
    %c0_25 = arith.constant 0 : index
    %47 = vector.load %arg4[%c0_23, %c0_24, %c0_25] : memref<1x2x8xf32, #tpu.memory_space<vmem>>, vector<1x2x8xf32>
    %48 = vector.shape_cast %47 : vector<1x2x8xf32> to vector<2x8xf32>
    %49 = vector.shape_cast %46 : vector<2x8xf32> to vector<1x2x8xf32>
    tpu.vector_store %arg4[%c0_23, %c0_24, %c0_25], %49 {strides = array<i32>} : memref<1x2x8xf32, #tpu.memory_space<vmem>>, vector<1x2x8xf32>,
    return
  }
  func.func @transform_0(%arg0: i32) -> (i32, i32, i32) {
    %c0_i32 = arith.constant 0 : i32
    %c0_i32_0 = arith.constant 0 : i32
    %c0_i32_1 = arith.constant 0 : i32
    return %arg0, %c0_i32, %c0_i32_0 : i32, i32, i32
  }
  func.func @transform_1(%arg0: i32) -> (i32, i32, i32) {
    %c0_i32 = arith.constant 0 : i32
    %c0_i32_0 = arith.constant 0 : i32
    %c0_i32_1 = arith.constant 0 : i32
    %c0_i32_2 = arith.constant 0 : i32
    return %c0_i32, %c0_i32_0, %c0_i32_1 : i32, i32, i32
  }
  func.func @transform_2(%arg0: i32) -> (i32, i32, i32) {
    %c0_i32 = arith.constant 0 : i32
    %c0_i32_0 = arith.constant 0 : i32
    %c0_i32_1 = arith.constant 0 : i32
    return %arg0, %c0_i32, %c0_i32_0 : i32, i32, i32
  }
  func.func @transform_3(%arg0: i32) -> (i32, i32, i32) {
    %c0_i32 = arith.constant 0 : i32
    %c0_i32_0 = arith.constant 0 : i32
    %c0_i32_1 = arith.constant 0 : i32
    return %arg0, %c0_i32, %c0_i32_0 : i32, i32, i32
  }
}

module attributes {stable_mosaic.version = 11 : i64} {
  func.func @kernel(%arg0: i32, %arg1: memref<1x8x128xf32, #tpu.memory_space<vmem>>, %arg2: memref<1x8x128xf32, #tpu.memory_space<vmem>>, %arg3: memref<1x8x1xf32, #tpu.memory_space<vmem>>, %arg4: memref<1x8x1xf32, #tpu.memory_space<vmem>>, %arg5: memref<1x8x128xf32, #tpu.memory_space<vmem>>) attributes {dimension_semantics = [#tpu.dimension_semantics<parallel>], iteration_bounds = array<i64: 2>, scalar_prefetch = 0 : i64, scratch_operands = 0 : i64, tpu.core_type = #tpu.core_type<tc>, window_params = [{transform_indices = @transform_0, window_bounds = array<i64: 1, 8, 128>}, {transform_indices = @transform_1, window_bounds = array<i64: 1, 8, 128>}, {pipeline_mode = #tpu.pipeline_mode<synchronous>, transform_indices = @transform_2, window_bounds = array<i64: 1, 8, 1>}, {pipeline_mode = #tpu.pipeline_mode<synchronous>, transform_indices = @transform_3, window_bounds = array<i64: 1, 8, 1>}, {transform_indices = @transform_4, window_bounds = array<i64: 1, 8, 128>}]} {
    %c0 = arith.constant 0 : index
    %c0_0 = arith.constant 0 : index
    %c0_1 = arith.constant 0 : index
    %0 = vector.load %arg1[%c0, %c0_0, %c0_1] : memref<1x8x128xf32, #tpu.memory_space<vmem>>, vector<1x8x128xf32>
    %c0_2 = arith.constant 0 : index
    %c0_3 = arith.constant 0 : index
    %c0_4 = arith.constant 0 : index
    %1 = vector.load %arg3[%c0_2, %c0_3, %c0_4] : memref<1x8x1xf32, #tpu.memory_space<vmem>>, vector<1x8x1xf32>
    %2 = vector.broadcast %1 : vector<1x8x1xf32> to vector<1x8x128xf32>
    %3 = arith.mulf %0, %2 : vector<1x8x128xf32>
    %c0_5 = arith.constant 0 : index
    %c0_6 = arith.constant 0 : index
    %c0_7 = arith.constant 0 : index
    %4 = vector.load %arg4[%c0_5, %c0_6, %c0_7] : memref<1x8x1xf32, #tpu.memory_space<vmem>>, vector<1x8x1xf32>
    %5 = vector.broadcast %4 : vector<1x8x1xf32> to vector<1x8x128xf32>
    %6 = arith.addf %3, %5 : vector<1x8x128xf32>
    %c0_8 = arith.constant 0 : index
    %c0_9 = arith.constant 0 : index
    %c0_10 = arith.constant 0 : index
    %7 = vector.load %arg2[%c0_8, %c0_9, %c0_10] : memref<1x8x128xf32, #tpu.memory_space<vmem>>, vector<1x8x128xf32>
    %8 = arith.addf %6, %7 : vector<1x8x128xf32>
    %cst = arith.constant 5.000000e-01 : f32
    %9 = vector.broadcast %cst : f32 to vector<1x8x128xf32>
    %10 = arith.mulf %9, %8 : vector<1x8x128xf32>
    %cst_11 = arith.constant 0.707106769 : f32
    %11 = vector.broadcast %cst_11 : f32 to vector<1x8x128xf32>
    %12 = arith.mulf %8, %11 : vector<1x8x128xf32>
    %13 = math.absf %12 : vector<1x8x128xf32>
    %cst_12 = arith.constant 0.327591091 : f32
    %14 = vector.broadcast %cst_12 : f32 to vector<1x8x128xf32>
    %15 = arith.mulf %14, %13 : vector<1x8x128xf32>
    %cst_13 = arith.constant 1.000000e+00 : f32
    %16 = vector.broadcast %cst_13 : f32 to vector<1x8x128xf32>
    %17 = arith.addf %16, %15 : vector<1x8x128xf32>
    %18 = tpu.reciprocal %17 {approx = true} : vector<1x8x128xf32> -> vector<1x8x128xf32>
    %19 = arith.mulf %17, %18 : vector<1x8x128xf32>
    %cst_14 = arith.constant 2.000000e+00 : f32
    %20 = vector.broadcast %cst_14 : f32 to vector<1x8x128xf32>
    %21 = arith.subf %20, %19 : vector<1x8x128xf32>
    %22 = arith.mulf %18, %21 : vector<1x8x128xf32>
    %cst_15 = arith.constant 1.06140542 : f32
    %23 = vector.broadcast %cst_15 : f32 to vector<1x8x128xf32>
    %24 = arith.mulf %23, %22 : vector<1x8x128xf32>
    %cst_16 = arith.constant -1.45315206 : f32
    %25 = vector.broadcast %cst_16 : f32 to vector<1x8x128xf32>
    %26 = arith.addf %24, %25 : vector<1x8x128xf32>
    %27 = arith.mulf %26, %22 : vector<1x8x128xf32>
    %cst_17 = arith.constant 1.42141378 : f32
    %28 = vector.broadcast %cst_17 : f32 to vector<1x8x128xf32>
    %29 = arith.addf %27, %28 : vector<1x8x128xf32>
    %30 = arith.mulf %29, %22 : vector<1x8x128xf32>
    %cst_18 = arith.constant -0.284496725 : f32
    %31 = vector.broadcast %cst_18 : f32 to vector<1x8x128xf32>
    %32 = arith.addf %30, %31 : vector<1x8x128xf32>
    %33 = arith.mulf %32, %22 : vector<1x8x128xf32>
    %cst_19 = arith.constant 0.254829586 : f32
    %34 = vector.broadcast %cst_19 : f32 to vector<1x8x128xf32>
    %35 = arith.addf %33, %34 : vector<1x8x128xf32>
    %36 = arith.mulf %35, %22 : vector<1x8x128xf32>
    %cst_20 = arith.constant 0.000000e+00 : f32
    %37 = vector.broadcast %cst_20 : f32 to vector<1x8x128xf32>
    %38 = arith.subf %37, %13 : vector<1x8x128xf32>
    %39 = arith.mulf %38, %13 : vector<1x8x128xf32>
    %40 = math.exp %39 : vector<1x8x128xf32>
    %41 = arith.mulf %36, %40 : vector<1x8x128xf32>
    %cst_21 = arith.constant 1.000000e+00 : f32
    %42 = vector.broadcast %cst_21 : f32 to vector<1x8x128xf32>
    %43 = arith.subf %42, %41 : vector<1x8x128xf32>
    %cst_22 = arith.constant 0.000000e+00 : f32
    %44 = vector.broadcast %cst_22 : f32 to vector<1x8x128xf32>
    %45 = arith.cmpf oge, %12, %44 : vector<1x8x128xf32>
    %cst_23 = arith.constant 0.000000e+00 : f32
    %46 = vector.broadcast %cst_23 : f32 to vector<1x8x128xf32>
    %47 = arith.subf %46, %43 : vector<1x8x128xf32>
    %48 = arith.select %45, %43, %47 : vector<1x8x128xi1>, vector<1x8x128xf32>
    %cst_24 = arith.constant 1.000000e+00 : f32
    %49 = vector.broadcast %cst_24 : f32 to vector<1x8x128xf32>
    %50 = arith.addf %49, %48 : vector<1x8x128xf32>
    %51 = arith.mulf %10, %50 : vector<1x8x128xf32>
    %c0_25 = arith.constant 0 : index
    %c0_26 = arith.constant 0 : index
    %c0_27 = arith.constant 0 : index
    %52 = vector.load %arg5[%c0_25, %c0_26, %c0_27] : memref<1x8x128xf32, #tpu.memory_space<vmem>>, vector<1x8x128xf32>
    tpu.vector_store %arg5[%c0_25, %c0_26, %c0_27], %51 {strides = array<i32>} : memref<1x8x128xf32, #tpu.memory_space<vmem>>, vector<1x8x128xf32>,
    return
  }
  func.func @transform_0(%arg0: i32) -> (i32, i32, i32) {
    %c0_i32 = arith.constant 0 : i32
    %c0_i32_0 = arith.constant 0 : i32
    %c0_i32_1 = arith.constant 0 : i32
    return %arg0, %c0_i32, %c0_i32_0 : i32, i32, i32
  }
  func.func @transform_1(%arg0: i32) -> (i32, i32, i32) {
    %c0_i32 = arith.constant 0 : i32
    %c0_i32_0 = arith.constant 0 : i32
    %c0_i32_1 = arith.constant 0 : i32
    return %arg0, %c0_i32, %c0_i32_0 : i32, i32, i32
  }
  func.func @transform_2(%arg0: i32) -> (i32, i32, i32) {
    %c0_i32 = arith.constant 0 : i32
    %c0_i32_0 = arith.constant 0 : i32
    %c0_i32_1 = arith.constant 0 : i32
    %c0_i32_2 = arith.constant 0 : i32
    return %c0_i32, %c0_i32_0, %c0_i32_1 : i32, i32, i32
  }
  func.func @transform_3(%arg0: i32) -> (i32, i32, i32) {
    %c0_i32 = arith.constant 0 : i32
    %c0_i32_0 = arith.constant 0 : i32
    %c0_i32_1 = arith.constant 0 : i32
    %c0_i32_2 = arith.constant 0 : i32
    return %c0_i32, %c0_i32_0, %c0_i32_1 : i32, i32, i32
  }
  func.func @transform_4(%arg0: i32) -> (i32, i32, i32) {
    %c0_i32 = arith.constant 0 : i32
    %c0_i32_0 = arith.constant 0 : i32
    %c0_i32_1 = arith.constant 0 : i32
    return %arg0, %c0_i32, %c0_i32_0 : i32, i32, i32
  }
}

module attributes {stable_mosaic.version = 11 : i64} {
  func.func @kernel(%arg0: i32, %arg1: memref<1x8x128xf32, #tpu.memory_space<vmem>>, %arg2: memref<3x8x8xf32, #tpu.memory_space<vmem>>, %arg3: memref<1x8x1xf32, #tpu.memory_space<vmem>>, %arg4: memref<1x8x1xf32, #tpu.memory_space<vmem>>, %arg5: memref<1x8x128xf32, #tpu.memory_space<vmem>>, %arg6: memref<1x2x8xf32, #tpu.memory_space<vmem>>) attributes {dimension_semantics = [#tpu.dimension_semantics<parallel>], iteration_bounds = array<i64: 2>, scalar_prefetch = 0 : i64, scratch_operands = 0 : i64, tpu.core_type = #tpu.core_type<tc>, window_params = [{transform_indices = @transform_0, window_bounds = array<i64: 1, 8, 128>}, {pipeline_mode = #tpu.pipeline_mode<synchronous>, transform_indices = @transform_1, window_bounds = array<i64: 3, 8, 8>}, {pipeline_mode = #tpu.pipeline_mode<synchronous>, transform_indices = @transform_2, window_bounds = array<i64: 1, 8, 1>}, {pipeline_mode = #tpu.pipeline_mode<synchronous>, transform_indices = @transform_3, window_bounds = array<i64: 1, 8, 1>}, {transform_indices = @transform_4, window_bounds = array<i64: 1, 8, 128>}, {transform_indices = @transform_5, window_bounds = array<i64: 1, 2, 8>}]} {
    %0 = tpu.iota {dimensions = array<i32: 2>} : vector<1x1x128xi32>
    %c0 = arith.constant 0 : index
    %c0_0 = arith.constant 0 : index
    %c0_1 = arith.constant 0 : index
    %1 = vector.load %arg1[%c0, %c0_0, %c0_1] : memref<1x8x128xf32, #tpu.memory_space<vmem>>, vector<1x8x128xf32>
    %c0_2 = arith.constant 0 : index
    %c0_3 = arith.constant 0 : index
    %c0_4 = arith.constant 0 : index
    %2 = vector.load %arg3[%c0_2, %c0_3, %c0_4] : memref<1x8x1xf32, #tpu.memory_space<vmem>>, vector<1x8x1xf32>
    %3 = vector.broadcast %2 : vector<1x8x1xf32> to vector<1x8x128xf32>
    %4 = arith.mulf %1, %3 : vector<1x8x128xf32>
    %c0_5 = arith.constant 0 : index
    %c0_6 = arith.constant 0 : index
    %c0_7 = arith.constant 0 : index
    %5 = vector.load %arg4[%c0_5, %c0_6, %c0_7] : memref<1x8x1xf32, #tpu.memory_space<vmem>>, vector<1x8x1xf32>
    %6 = vector.broadcast %5 : vector<1x8x1xf32> to vector<1x8x128xf32>
    %7 = arith.addf %4, %6 : vector<1x8x128xf32>
    %cst = arith.constant 5.000000e-01 : f32
    %8 = vector.broadcast %cst : f32 to vector<1x8x128xf32>
    %9 = arith.mulf %8, %7 : vector<1x8x128xf32>
    %cst_8 = arith.constant 0.707106769 : f32
    %10 = vector.broadcast %cst_8 : f32 to vector<1x8x128xf32>
    %11 = arith.mulf %7, %10 : vector<1x8x128xf32>
    %12 = math.absf %11 : vector<1x8x128xf32>
    %cst_9 = arith.constant 0.327591091 : f32
    %13 = vector.broadcast %cst_9 : f32 to vector<1x8x128xf32>
    %14 = arith.mulf %13, %12 : vector<1x8x128xf32>
    %cst_10 = arith.constant 1.000000e+00 : f32
    %15 = vector.broadcast %cst_10 : f32 to vector<1x8x128xf32>
    %16 = arith.addf %15, %14 : vector<1x8x128xf32>
    %17 = tpu.reciprocal %16 {approx = true} : vector<1x8x128xf32> -> vector<1x8x128xf32>
    %18 = arith.mulf %16, %17 : vector<1x8x128xf32>
    %cst_11 = arith.constant 2.000000e+00 : f32
    %19 = vector.broadcast %cst_11 : f32 to vector<1x8x128xf32>
    %20 = arith.subf %19, %18 : vector<1x8x128xf32>
    %21 = arith.mulf %17, %20 : vector<1x8x128xf32>
    %cst_12 = arith.constant 1.06140542 : f32
    %22 = vector.broadcast %cst_12 : f32 to vector<1x8x128xf32>
    %23 = arith.mulf %22, %21 : vector<1x8x128xf32>
    %cst_13 = arith.constant -1.45315206 : f32
    %24 = vector.broadcast %cst_13 : f32 to vector<1x8x128xf32>
    %25 = arith.addf %23, %24 : vector<1x8x128xf32>
    %26 = arith.mulf %25, %21 : vector<1x8x128xf32>
    %cst_14 = arith.constant 1.42141378 : f32
    %27 = vector.broadcast %cst_14 : f32 to vector<1x8x128xf32>
    %28 = arith.addf %26, %27 : vector<1x8x128xf32>
    %29 = arith.mulf %28, %21 : vector<1x8x128xf32>
    %cst_15 = arith.constant -0.284496725 : f32
    %30 = vector.broadcast %cst_15 : f32 to vector<1x8x128xf32>
    %31 = arith.addf %29, %30 : vector<1x8x128xf32>
    %32 = arith.mulf %31, %21 : vector<1x8x128xf32>
    %cst_16 = arith.constant 0.254829586 : f32
    %33 = vector.broadcast %cst_16 : f32 to vector<1x8x128xf32>
    %34 = arith.addf %32, %33 : vector<1x8x128xf32>
    %35 = arith.mulf %34, %21 : vector<1x8x128xf32>
    %cst_17 = arith.constant 0.000000e+00 : f32
    %36 = vector.broadcast %cst_17 : f32 to vector<1x8x128xf32>
    %37 = arith.subf %36, %12 : vector<1x8x128xf32>
    %38 = arith.mulf %37, %12 : vector<1x8x128xf32>
    %39 = math.exp %38 : vector<1x8x128xf32>
    %40 = arith.mulf %35, %39 : vector<1x8x128xf32>
    %cst_18 = arith.constant 1.000000e+00 : f32
    %41 = vector.broadcast %cst_18 : f32 to vector<1x8x128xf32>
    %42 = arith.subf %41, %40 : vector<1x8x128xf32>
    %cst_19 = arith.constant 0.000000e+00 : f32
    %43 = vector.broadcast %cst_19 : f32 to vector<1x8x128xf32>
    %44 = arith.cmpf oge, %11, %43 : vector<1x8x128xf32>
    %cst_20 = arith.constant 0.000000e+00 : f32
    %45 = vector.broadcast %cst_20 : f32 to vector<1x8x128xf32>
    %46 = arith.subf %45, %42 : vector<1x8x128xf32>
    %47 = arith.select %44, %42, %46 : vector<1x8x128xi1>, vector<1x8x128xf32>
    %cst_21 = arith.constant 1.000000e+00 : f32
    %48 = vector.broadcast %cst_21 : f32 to vector<1x8x128xf32>
    %49 = arith.addf %48, %47 : vector<1x8x128xf32>
    %50 = arith.mulf %9, %49 : vector<1x8x128xf32>
    %c16_i32 = arith.constant 16 : i32
    %51 = vector.broadcast %c16_i32 : i32 to vector<1x1x128xi32>
    %52 = arith.cmpi slt, %0, %51 : vector<1x1x128xi32>
    %cst_22 = arith.constant 0.000000e+00 : f32
    %53 = vector.shape_cast %52 : vector<1x1x128xi1> to vector<1x1x128xi1>
    %54 = vector.broadcast %53 : vector<1x1x128xi1> to vector<1x8x128xi1>
    %55 = vector.broadcast %cst_22 : f32 to vector<1x8x128xf32>
    %56 = arith.select %54, %50, %55 : vector<1x8x128xi1>, vector<1x8x128xf32>
    %cst_23 = arith.constant 0.000000e+00 : f32
    %57 = vector.broadcast %cst_23 : f32 to vector<1x8x128xf32>
    %c1_i32 = arith.constant 1 : i32
    %58 = tpu.dynamic_rotate %56 by %c1_i32 dim 2 : vector<1x8x128xf32>, i32 -> vector<1x8x128xf32>
    %c1_i32_24 = arith.constant 1 : i32
    %59 = vector.broadcast %c1_i32_24 : i32 to vector<1x1x128xi32>
    %60 = arith.cmpi sge, %0, %59 : vector<1x1x128xi32>
    %cst_25 = arith.constant 0.000000e+00 : f32
    %61 = vector.shape_cast %60 : vector<1x1x128xi1> to vector<1x1x128xi1>
    %62 = vector.broadcast %61 : vector<1x1x128xi1> to vector<1x8x128xi1>
    %63 = vector.broadcast %cst_25 : f32 to vector<1x8x128xf32>
    %64 = arith.select %62, %58, %63 : vector<1x8x128xi1>, vector<1x8x128xf32>
    %c0_26 = arith.constant 0 : index
    %c0_27 = arith.constant 0 : index
    %c0_28 = arith.constant 0 : index
    %65 = vector.load %arg2[%c0_26, %c0_27, %c0_28] : memref<3x8x8xf32, #tpu.memory_space<vmem>>, vector<1x8x8xf32>
    %66 = vector.shape_cast %65 : vector<1x8x8xf32> to vector<8x8xf32>
    %67 = vector.shape_cast %66 : vector<8x8xf32> to vector<1x8x8xf32>
    "tpu.trace_start"() <{level = 10 : i32, message = "toc,tcl->tol"}> : () -> ()
    %cst_29 = arith.constant dense<0.000000e+00> : vector<1x8x128xf32>
    %68 = tpu.matmul %67, %64, %cst_29 {dimension_numbers = #tpu.dot_dimension_numbers<[2], [1], [1], [2], [0, 0, 0, 1, 1, 2], [0], [0]>} : vector<1x8x8xf32>, vector<1x8x128xf32>, vector<1x8x128xf32> -> vector<1x8x128xf32>
    "tpu.trace_stop"() : () -> ()
    %69 = arith.addf %57, %68 : vector<1x8x128xf32>
    %c1 = arith.constant 1 : index
    %c0_30 = arith.constant 0 : index
    %c0_31 = arith.constant 0 : index
    %70 = vector.load %arg2[%c1, %c0_30, %c0_31] : memref<3x8x8xf32, #tpu.memory_space<vmem>>, vector<1x8x8xf32>
    %71 = vector.shape_cast %70 : vector<1x8x8xf32> to vector<8x8xf32>
    %72 = vector.shape_cast %71 : vector<8x8xf32> to vector<1x8x8xf32>
    "tpu.trace_start"() <{level = 10 : i32, message = "toc,tcl->tol"}> : () -> ()
    %cst_32 = arith.constant dense<0.000000e+00> : vector<1x8x128xf32>
    %73 = tpu.matmul %72, %56, %cst_32 {dimension_numbers = #tpu.dot_dimension_numbers<[2], [1], [1], [2], [0, 0, 0, 1, 1, 2], [0], [0]>} : vector<1x8x8xf32>, vector<1x8x128xf32>, vector<1x8x128xf32> -> vector<1x8x128xf32>
    "tpu.trace_stop"() : () -> ()
    %74 = arith.addf %69, %73 : vector<1x8x128xf32>
    %c127_i32 = arith.constant 127 : i32
    %75 = tpu.dynamic_rotate %56 by %c127_i32 dim 2 : vector<1x8x128xf32>, i32 -> vector<1x8x128xf32>
    %c15_i32 = arith.constant 15 : i32
    %76 = vector.broadcast %c15_i32 : i32 to vector<1x1x128xi32>
    %77 = arith.cmpi slt, %0, %76 : vector<1x1x128xi32>
    %cst_33 = arith.constant 0.000000e+00 : f32
    %78 = vector.shape_cast %77 : vector<1x1x128xi1> to vector<1x1x128xi1>
    %79 = vector.broadcast %78 : vector<1x1x128xi1> to vector<1x8x128xi1>
    %80 = vector.broadcast %cst_33 : f32 to vector<1x8x128xf32>
    %81 = arith.select %79, %75, %80 : vector<1x8x128xi1>, vector<1x8x128xf32>
    %c2 = arith.constant 2 : index
    %c0_34 = arith.constant 0 : index
    %c0_35 = arith.constant 0 : index
    %82 = vector.load %arg2[%c2, %c0_34, %c0_35] : memref<3x8x8xf32, #tpu.memory_space<vmem>>, vector<1x8x8xf32>
    %83 = vector.shape_cast %82 : vector<1x8x8xf32> to vector<8x8xf32>
    %84 = vector.shape_cast %83 : vector<8x8xf32> to vector<1x8x8xf32>
    "tpu.trace_start"() <{level = 10 : i32, message = "toc,tcl->tol"}> : () -> ()
    %cst_36 = arith.constant dense<0.000000e+00> : vector<1x8x128xf32>
    %85 = tpu.matmul %84, %81, %cst_36 {dimension_numbers = #tpu.dot_dimension_numbers<[2], [1], [1], [2], [0, 0, 0, 1, 1, 2], [0], [0]>} : vector<1x8x8xf32>, vector<1x8x128xf32>, vector<1x8x128xf32> -> vector<1x8x128xf32>
    "tpu.trace_stop"() : () -> ()
    %86 = arith.addf %74, %85 : vector<1x8x128xf32>
    %c16_i32_37 = arith.constant 16 : i32
    %87 = vector.broadcast %c16_i32_37 : i32 to vector<1x1x128xi32>
    %88 = arith.cmpi slt, %0, %87 : vector<1x1x128xi32>
    %cst_38 = arith.constant 0.000000e+00 : f32
    %89 = vector.shape_cast %88 : vector<1x1x128xi1> to vector<1x1x128xi1>
    %90 = vector.broadcast %89 : vector<1x1x128xi1> to vector<1x8x128xi1>
    %91 = vector.broadcast %cst_38 : f32 to vector<1x8x128xf32>
    %92 = arith.select %90, %86, %91 : vector<1x8x128xi1>, vector<1x8x128xf32>
    %c0_39 = arith.constant 0 : index
    %c0_40 = arith.constant 0 : index
    %c0_41 = arith.constant 0 : index
    %93 = vector.load %arg5[%c0_39, %c0_40, %c0_41] : memref<1x8x128xf32, #tpu.memory_space<vmem>>, vector<1x8x128xf32>
    tpu.vector_store %arg5[%c0_39, %c0_40, %c0_41], %92 {strides = array<i32>} : memref<1x8x128xf32, #tpu.memory_space<vmem>>, vector<1x8x128xf32>,
    %cst_42 = arith.constant dense<0.000000e+00> : vector<1x8xf32>
    %94 = vector.multi_reduction <add>, %92, %cst_42 [2] : vector<1x8x128xf32> to vector<1x8xf32>
    %cst_43 = arith.constant dense<0.000000e+00> : vector<8xf32>
    %95 = vector.multi_reduction <add>, %94, %cst_43 [0] : vector<1x8xf32> to vector<8xf32>
    %96 = vector.shape_cast %95 : vector<8xf32> to vector<1x8xf32>
    %97 = arith.mulf %92, %92 : vector<1x8x128xf32>
    %cst_44 = arith.constant dense<0.000000e+00> : vector<1x8xf32>
    %98 = vector.multi_reduction <add>, %97, %cst_44 [2] : vector<1x8x128xf32> to vector<1x8xf32>
    %cst_45 = arith.constant dense<0.000000e+00> : vector<8xf32>
    %99 = vector.multi_reduction <add>, %98, %cst_45 [0] : vector<1x8xf32> to vector<8xf32>
    %100 = vector.shape_cast %99 : vector<8xf32> to vector<1x8xf32>
    %101 = tpu.concatenate %96, %100 in 0 : vector<1x8xf32>, vector<1x8xf32> -> vector<2x8xf32>
    %c0_46 = arith.constant 0 : index
    %c0_47 = arith.constant 0 : index
    %c0_48 = arith.constant 0 : index
    %102 = vector.load %arg6[%c0_46, %c0_47, %c0_48] : memref<1x2x8xf32, #tpu.memory_space<vmem>>, vector<1x2x8xf32>
    %103 = vector.shape_cast %102 : vector<1x2x8xf32> to vector<2x8xf32>
    %104 = vector.shape_cast %101 : vector<2x8xf32> to vector<1x2x8xf32>
    tpu.vector_store %arg6[%c0_46, %c0_47, %c0_48], %104 {strides = array<i32>} : memref<1x2x8xf32, #tpu.memory_space<vmem>>, vector<1x2x8xf32>,
    return
  }
  func.func @transform_0(%arg0: i32) -> (i32, i32, i32) {
    %c0_i32 = arith.constant 0 : i32
    %c0_i32_0 = arith.constant 0 : i32
    %c0_i32_1 = arith.constant 0 : i32
    return %arg0, %c0_i32, %c0_i32_0 : i32, i32, i32
  }
  func.func @transform_1(%arg0: i32) -> (i32, i32, i32) {
    %c0_i32 = arith.constant 0 : i32
    %c0_i32_0 = arith.constant 0 : i32
    %c0_i32_1 = arith.constant 0 : i32
    %c0_i32_2 = arith.constant 0 : i32
    return %c0_i32, %c0_i32_0, %c0_i32_1 : i32, i32, i32
  }
  func.func @transform_2(%arg0: i32) -> (i32, i32, i32) {
    %c0_i32 = arith.constant 0 : i32
    %c0_i32_0 = arith.constant 0 : i32
    %c0_i32_1 = arith.constant 0 : i32
    %c0_i32_2 = arith.constant 0 : i32
    return %c0_i32, %c0_i32_0, %c0_i32_1 : i32, i32, i32
  }
  func.func @transform_3(%arg0: i32) -> (i32, i32, i32) {
    %c0_i32 = arith.constant 0 : i32
    %c0_i32_0 = arith.constant 0 : i32
    %c0_i32_1 = arith.constant 0 : i32
    %c0_i32_2 = arith.constant 0 : i32
    return %c0_i32, %c0_i32_0, %c0_i32_1 : i32, i32, i32
  }
  func.func @transform_4(%arg0: i32) -> (i32, i32, i32) {
    %c0_i32 = arith.constant 0 : i32
    %c0_i32_0 = arith.constant 0 : i32
    %c0_i32_1 = arith.constant 0 : i32
    return %arg0, %c0_i32, %c0_i32_0 : i32, i32, i32
  }
  func.func @transform_5(%arg0: i32) -> (i32, i32, i32) {
    %c0_i32 = arith.constant 0 : i32
    %c0_i32_0 = arith.constant 0 : i32
    %c0_i32_1 = arith.constant 0 : i32
    return %arg0, %c0_i32, %c0_i32_0 : i32, i32, i32
  }
}

</mosaic_0001>

<llo_original>
// kernel: residual_conv_block.3
$region0: #{residual_conv_block.3}
  #allocation0 [shape = 'u32[]', space=smem, size = 0x4, offset = 0x4, fixed_abs, tag = 'smem constant byte address 0x4 - core index']
  #allocation1 [shape = 'u32[144,128]{1,0:T(1,128)}', space=vmem, size = 0x12000, scoped, tag = 'internal scratch']
  %s0 = inlined_call_operand.vmem [shape: f32[2,8,128], index: 0, kind: input, shape index: {}]
  %s1 = inlined_call_operand.vmem [shape: f32[3,8,8], index: 1, kind: input, shape index: {}]
  %s2 = inlined_call_operand.vmem [shape: f32[2,8,128], index: 2, kind: output, shape index: {0}]
  %s3 = inlined_call_operand.vmem [shape: f32[2,2,8], index: 3, kind: output, shape index: {1}]
  %4 = xla_tuple %s2, %s3
  %s5 = sld [smem:[#allocation0]]
  $region49: #{residual_conv_block.3} parent=0
    _
  %s7 = ssub.s32 1, %s5
  %s8 = scalar_select 0, %s7, %s5
  loop: start=0, step=1, limit=4
  $region2: #{residual_conv_block.3} parent=0 // loop_pre_header
    _
  $region3: #{residual_conv_block.3} parent=0 // loop_header
    %s10 = sphi 0, %s14
    %p11 = scmp.ge.s32.totalorder %s10, 4
    %s20 = sphi 0, %s22
    %s23 = sphi 0, %s20
    %s24 = sphi 0, %s23
    %s40 = sphi 0, %s24
    %s44 = sphi 0, %s44
    %s46 = sphi 0, %s44
    %s47 = sphi 0, %s46
    %s61 = sphi 0, %s47
    %s67 = sphi 0, %s69
    %s70 = sphi 0, %s67
    %s71 = sphi 0, %s70
    %s87 = sphi 0, %s71
    %s93 = sphi 0, %s95
    %s96 = sphi 0, %s93
    %s97 = sphi 0, %s96
    %s113 = sphi 0, %s97
  $region4: #{residual_conv_block.3} parent=0 // loop_header_branch
    %13 = sbr.rel (%p11) target = $region8
  $region5: #{residual_conv_block.3} parent=0 // loop_body
    %s15 = ssub.s32 %s10, 1
    %s16 = ssub.s32 %s10, 2
    %s17 = sadd.s32 %s10, 1
    %s18 = ssub.s32 %s10, %s17
    %p19 = scmp.eq.s32.totalorder %s18, 0
    %s21 = sadd.s32 %s20, 1
    %s22 = scalar_select %p19, %s20, %s21
    %p25 = pneg %p19
    %p26 = scmp.eq.s32.totalorder %s10, 1
    %p27 = por %p25, %p26
    %p28 = scmp.ne.s32.totalorder %s20, %s23
    %p29 = scmp.eq.s32.totalorder %s10, 0
    %p30 = por %p28, %p29
    %p31 = scmp.ne.s32.totalorder %s20, %s23
    %p32 = scmp.eq.s32.totalorder %s15, 1
    %p33 = por %p31, %p32
    %p34 = scmp.ne.s32.totalorder %s23, %s24
    %p35 = scmp.eq.s32.totalorder %s15, 0
    %p36 = por %p34, %p35
    %p37 = scmp.ne.s32.totalorder %s23, %s24
    %p38 = scmp.eq.s32.totalorder %s16, 1
    %p39 = por %p37, %p38
    %p41 = scmp.ne.s32.totalorder %s24, %s40
    %p42 = scmp.eq.s32.totalorder %s16, 0
    %p43 = por %p41, %p42
    %s45 = sadd.s32 %s44, 1
    %p48 = scmp.eq.s32.totalorder %s10, 1
    %p49 = scmp.ne.s32.totalorder %s44, %s46
    %p50 = scmp.eq.s32.totalorder %s10, 0
    %p51 = por %p49, %p50
    %p52 = scmp.ne.s32.totalorder %s44, %s46
    %p53 = scmp.eq.s32.totalorder %s15, 1
    %p54 = por %p52, %p53
    %p55 = scmp.ne.s32.totalorder %s46, %s47
    %p56 = scmp.eq.s32.totalorder %s15, 0
    %p57 = por %p55, %p56
    %p58 = scmp.ne.s32.totalorder %s46, %s47
    %p59 = scmp.eq.s32.totalorder %s16, 1
    %p60 = por %p58, %p59
    %p62 = scmp.ne.s32.totalorder %s47, %s61
    %p63 = scmp.eq.s32.totalorder %s16, 0
    %p64 = por %p62, %p63
    %s65 = ssub.s32 %s10, %s17
    %p66 = scmp.eq.s32.totalorder %s65, 0
    %s68 = sadd.s32 %s67, 1
    %s69 = scalar_select %p66, %s67, %s68
    %p72 = pneg %p66
    %p73 = scmp.eq.s32.totalorder %s10, 1
    %p74 = por %p72, %p73
    %p75 = scmp.ne.s32.totalorder %s67, %s70
    %p76 = scmp.eq.s32.totalorder %s10, 0
    %p77 = por %p75, %p76
    %p78 = scmp.ne.s32.totalorder %s67, %s70
    %p79 = scmp.eq.s32.totalorder %s15, 1
    %p80 = por %p78, %p79
    %p81 = scmp.ne.s32.totalorder %s70, %s71
    %p82 = scmp.eq.s32.totalorder %s15, 0
    %p83 = por %p81, %p82
    %p84 = scmp.ne.s32.totalorder %s70, %s71
    %p85 = scmp.eq.s32.totalorder %s16, 1
    %p86 = por %p84, %p85
    %p88 = scmp.ne.s32.totalorder %s71, %s87
    %p89 = scmp.eq.s32.totalorder %s16, 0
    %p90 = por %p88, %p89
    %s91 = ssub.s32 %s10, %s17
    %p92 = scmp.eq.s32.totalorder %s91, 0
    %s94 = sadd.s32 %s93, 1
    %s95 = scalar_select %p92, %s93, %s94
    %p98 = pneg %p92
    %p99 = scmp.eq.s32.totalorder %s10, 1
    %p100 = por %p98, %p99
    %p101 = scmp.ne.s32.totalorder %s93, %s96
    %p102 = scmp.eq.s32.totalorder %s10, 0
    %p103 = por %p101, %p102
    %p104 = scmp.ne.s32.totalorder %s93, %s96
    %p105 = scmp.eq.s32.totalorder %s15, 1
    %p106 = por %p104, %p105
    %p107 = scmp.ne.s32.totalorder %s96, %s97
    %p108 = scmp.eq.s32.totalorder %s15, 0
    %p109 = por %p107, %p108
    %p110 = scmp.ne.s32.totalorder %s96, %s97
    %p111 = scmp.eq.s32.totalorder %s16, 1
    %p112 = por %p110, %p111
    %p114 = scmp.ne.s32.totalorder %s97, %s113
    %p115 = scmp.eq.s32.totalorder %s16, 0
    %p116 = por %p114, %p115
    %p117 = scmp.le.s32.totalorder 1, %s10
    %p118 = scmp.lt.s32.totalorder %s10, 3
    %p119 = pnand %p117, %p118
    %p120 = pneg %p119
    // Predicated region
    $region9: #{residual_conv_block.3} parent=5 // pred_check
      _
    $region10: #{residual_conv_block.3} parent=5 // pred_check_branch
      %122 = sbr.rel (%p119) target = $region12
    $region11: #{residual_conv_block.3} parent=5 // pred_region
      %s123 = ssub.s32 %s10, 1
      // Predicated region
      $region13: #{residual_conv_block.3} parent=11 // pred_check
        %p124 = pneg %p57
      $region14: #{residual_conv_block.3} parent=11 // pred_check_branch
        %126 = sbr.rel (%p124) target = $region16
      $region15: #{residual_conv_block.3} parent=11 // pred_region
        _
      $region16: #{residual_conv_block.3} parent=11 // pred_fallthru
        _
    $region12: #{residual_conv_block.3} parent=5 // pred_fallthru
      _
    %p127 = scmp.lt.s32.totalorder %s10, 2
    // Predicated region
    $region17: #{residual_conv_block.3} parent=5 // pred_check
      %p128 = pneg %p127
    $region18: #{residual_conv_block.3} parent=5 // pred_check_branch
      %130 = sbr.rel (%p128) target = $region20
    $region19: #{residual_conv_block.3} parent=5 // pred_region
      // Predicated region
      $region21: #{residual_conv_block.3} parent=19 // pred_check
        %p131 = pneg %p30
      $region22: #{residual_conv_block.3} parent=19 // pred_check_branch
        %133 = sbr.rel (%p131) target = $region24
      $region23: #{residual_conv_block.3} parent=19 // pred_region
        %p134 = scmp.lt.s32.totalorder %s10, 1
        %s135 = scalar_select %p134, %s10, 1
        %s136 = smul.addr %s135, 8
        %s137 = scalar_lea.vmem %s0, %s136
      $region24: #{residual_conv_block.3} parent=19 // pred_fallthru
        _
    $region20: #{residual_conv_block.3} parent=5 // pred_fallthru
      _
    %p138 = scmp.le.s32.totalorder 1, %s10
    %p139 = scmp.lt.s32.totalorder %s10, 3
    %p140 = pnand %p138, %p139
    %p141 = pneg %p140
    // Predicated region
    $region25: #{residual_conv_block.3} parent=5 // pred_check
      _
    $region26: #{residual_conv_block.3} parent=5 // pred_check_branch
      %143 = sbr.rel (%p140) target = $region28
    $region27: #{residual_conv_block.3} parent=5 // pred_region
      %s144 = ssub.s32 %s10, 1
      %p145 = scmp.lt.s32.totalorder %s15, 1
      %s146 = scalar_select %p145, %s15, 1
      %s147 = smul.addr %s146, 8
      %s148 = scalar_lea.vmem %s0, %s147
      %p149 = pneg %p36
      %p150 = pneg %p33
      %p151 = pneg %p57
      %p152 = pneg %p54
      %p153 = pneg %p83
      %p154 = pneg %p80
      %p155 = scmp.lt.s32.totalorder %s15, 1
      %s156 = scalar_select %p155, %s15, 1
      %s157 = smul.addr %s156, 8
      %s158 = scalar_lea.vmem %s2, %s157
      %p159 = pneg %p109
      %p160 = pneg %p106
      %p161 = scmp.lt.s32.totalorder %s15, 1
      %s162 = scalar_select %p161, %s15, 1
      %s163 = smul.addr %s162, 2
      %s164 = scalar_lea.vmem %s3, %s163
      %p165 = scmp.lt.s32.totalorder %s15, 1
      %s166 = scalar_select %p165, %s15, 1
      %s167 = smul.addr %s166, 8
      %s168 = scalar_lea.vmem %s0, %s167
      %p169 = scmp.lt.s32.totalorder %s15, 1
      %s170 = scalar_select %p169, %s15, 1
      %s171 = smul.addr %s170, 8
      %s172 = scalar_lea.vmem %s2, %s171
      %p173 = scmp.lt.s32.totalorder %s15, 1
      %s174 = scalar_select %p173, %s15, 1
      %s175 = smul.addr %s174, 2
      %s176 = scalar_lea.vmem %s3, %s175
      %v177 = vlaneseq
      %v178 = vand.u32 %v177, 127
      %v179 = vld [vmem:[%s168] sm:$0xff]
      %180 = vrot.lane.b32.xlu0 %v179, 1
      %v181 = vpop.permute.xlu0 %180
      %vm182 = vcmp.ge.s32.totalorder %v178, 1
      %v183 = vsel %vm182, 1, 0
      %vm184 = vcmp.eq.s32.totalorder %v183, 1
      %v185 = vsel %vm184, %v181, 0.0
      %v186 = vld [vmem:[%s1] sm:$0xff]
      %s187 = scalar_lea.vmem %s1, 8
      %v188 = vld [vmem:[%s187] sm:$0xff]
      %vm189 = vcmask 64512
      %v191 = vsel %vm189, %v188, 0
      %193 = vmatprep.subr.mxu0 0.0
      %194 = vmatpush1.msra.mxu0 %v179
      %195 = vmatprep.subr.mxu0 0.0
      %196 = vmatpush1.msra.mxu0 0.0
      %197 = vmatprep.subr.mxu0 0.0
      %198 = vmatpush1.msra.mxu0 0.0
      %199 = vmatprep.subr.mxu0 0.0
      %200 = vmatpush1.msra.mxu0 0.0
      %201 = vmatprep.subr.mxu0 0.0
      %202 = vmatpush1.msra.mxu0 0.0
      %203 = vmatprep.subr.mxu0 0.0
      %204 = vmatpush1.msra.mxu0 0.0
      %205 = vmatprep.subr.mxu0 0.0
      %206 = vmatpush1.msra.mxu0 0.0
      %207 = vmatprep.subr.mxu0 0.0
      %208 = vmatpush1.msra.mxu0 0.0
      %209 = vmatprep.subr.mxu0 0.0
      %210 = vmatpush1.msra.mxu0 0.0
      %211 = vmatprep.subr.mxu0 0.0
      %212 = vmatpush1.msra.mxu0 0.0
      %213 = vmatprep.subr.mxu0 0.0
      %214 = vmatpush1.msra.mxu0 0.0
      %215 = vmatprep.subr.mxu0 0.0
      %216 = vmatpush1.msra.mxu0 0.0
      %217 = vmatprep.subr.mxu0 0.0
      %218 = vmatpush1.msra.mxu0 0.0
      %219 = vmatprep.subr.mxu0 0.0
      %220 = vmatpush1.msra.mxu0 0.0
      %221 = vmatprep.subr.mxu0 0.0
      %222 = vmatpush1.msra.mxu0 0.0
      %223 = vmatprep.subr.mxu0 0.0
      %224 = vmatpush1.msra.mxu0 0.0
      %225 = vmatprep.subr.mxu0 0.0
      %226 = vmatpush1.msra.mxu0 0.0
      %227 = vmatprep.subr.mxu0 0.0
      %228 = vmatpush1.msra.mxu0 0.0
      %229 = vmatprep.subr.mxu0 0.0
      %230 = vmatpush1.msra.mxu0 0.0
      %231 = vmatprep.subr.mxu0 0.0
      %232 = vmatpush1.msra.mxu0 0.0
      %233 = vmatprep.subr.mxu0 0.0
      %234 = vmatpush1.msra.mxu0 0.0
      %235 = vmatprep.subr.mxu0 0.0
      %236 = vmatpush1.msra.mxu0 0.0
      %237 = vmatprep.subr.mxu0 0.0
      %238 = vmatpush1.msra.mxu0 0.0
      %239 = vmatprep.subr.mxu0 0.0
      %240 = vmatpush1.msra.mxu0 0.0
      %241 = vmatprep.subr.mxu0 0.0
      %242 = vmatpush1.msra.mxu0 0.0
      %243 = vmatprep.subr.mxu0 0.0
      %244 = vmatpush1.msra.mxu0 0.0
      %245 = vmatprep.subr.mxu0 0.0
      %246 = vmatpush1.msra.mxu0 0.0
      %247 = vmatprep.subr.mxu0 0.0
      %248 = vmatpush1.msra.mxu0 0.0
      %249 = vmatprep.subr.mxu0 0.0
      %250 = vmatpush1.msra.mxu0 0.0
      %251 = vmatprep.subr.mxu0 0.0
      %252 = vmatpush1.msra.mxu0 0.0
      %253 = vmatprep.subr.mxu0 0.0
      %254 = vmatpush1.msra.mxu0 0.0
      %255 = vmatprep.subr.mxu0 0.0
      %256 = vmatpush1.msra.mxu0 0.0
      %257 = vmatprep.mubr.f32.mxu0 0.0
      %258 = vmatmul.mubr.f32.gmra.mrb[0].mxu0 %v191
      %v259 = vpop.f32.mrb[0].mxu0
      %v260 = vadd.f32 0.0, %v259
      %v261 = vpop.f32.mrb[0].mxu0
      %262 = vdwg.mxu0
      %v264 = vsel %vm189, %v186, 0
      %266 = vmatprep.subr.mxu0 0.0
      %267 = vmatpush1.msra.mxu0 %v185
      %268 = vmatprep.subr.mxu0 0.0
      %269 = vmatpush1.msra.mxu0 0.0
      %270 = vmatprep.subr.mxu0 0.0
      %271 = vmatpush1.msra.mxu0 0.0
      %272 = vmatprep.subr.mxu0 0.0
      %273 = vmatpush1.msra.mxu0 0.0
      %274 = vmatprep.subr.mxu0 0.0
      %275 = vmatpush1.msra.mxu0 0.0
      %276 = vmatprep.subr.mxu0 0.0
      %277 = vmatpush1.msra.mxu0 0.0
      %278 = vmatprep.subr.mxu0 0.0
      %279 = vmatpush1.msra.mxu0 0.0
      %280 = vmatprep.subr.mxu0 0.0
      %281 = vmatpush1.msra.mxu0 0.0
      %282 = vmatprep.subr.mxu0 0.0
      %283 = vmatpush1.msra.mxu0 0.0
      %284 = vmatprep.subr.mxu0 0.0
      %285 = vmatpush1.msra.mxu0 0.0
      %286 = vmatprep.subr.mxu0 0.0
      %287 = vmatpush1.msra.mxu0 0.0
      %288 = vmatprep.subr.mxu0 0.0
      %289 = vmatpush1.msra.mxu0 0.0
      %290 = vmatprep.subr.mxu0 0.0
      %291 = vmatpush1.msra.mxu0 0.0
      %292 = vmatprep.subr.mxu0 0.0
      %293 = vmatpush1.msra.mxu0 0.0
      %294 = vmatprep.subr.mxu0 0.0
      %295 = vmatpush1.msra.mxu0 0.0
      %296 = vmatprep.subr.mxu0 0.0
      %297 = vmatpush1.msra.mxu0 0.0
      %298 = vmatprep.subr.mxu0 0.0
      %299 = vmatpush1.msra.mxu0 0.0
      %300 = vmatprep.subr.mxu0 0.0
      %301 = vmatpush1.msra.mxu0 0.0
      %302 = vmatprep.subr.mxu0 0.0
      %303 = vmatpush1.msra.mxu0 0.0
      %304 = vmatprep.subr.mxu0 0.0
      %305 = vmatpush1.msra.mxu0 0.0
      %306 = vmatprep.subr.mxu0 0.0
      %307 = vmatpush1.msra.mxu0 0.0
      %308 = vmatprep.subr.mxu0 0.0
      %309 = vmatpush1.msra.mxu0 0.0
      %310 = vmatprep.subr.mxu0 0.0
      %311 = vmatpush1.msra.mxu0 0.0
      %312 = vmatprep.subr.mxu0 0.0
      %313 = vmatpush1.msra.mxu0 0.0
      %314 = vmatprep.subr.mxu0 0.0
      %315 = vmatpush1.msra.mxu0 0.0
      %316 = vmatprep.subr.mxu0 0.0
      %317 = vmatpush1.msra.mxu0 0.0
      %318 = vmatprep.subr.mxu0 0.0
      %319 = vmatpush1.msra.mxu0 0.0
      %320 = vmatprep.subr.mxu0 0.0
      %321 = vmatpush1.msra.mxu0 0.0
      %322 = vmatprep.subr.mxu0 0.0
      %323 = vmatpush1.msra.mxu0 0.0
      %324 = vmatprep.subr.mxu0 0.0
      %325 = vmatpush1.msra.mxu0 0.0
      %326 = vmatprep.subr.mxu0 0.0
      %327 = vmatpush1.msra.mxu0 0.0
      %328 = vmatprep.subr.mxu0 0.0
      %329 = vmatpush1.msra.mxu0 0.0
      %330 = vmatprep.mubr.f32.mxu0 0.0
      %331 = vmatmul.mubr.f32.gmra.mrb[0].mxu0 %v264
      %v332 = vpop.f32.mrb[0].mxu0
      %v333 = vadd.f32 %v260, %v332
      %v334 = vpop.f32.mrb[0].mxu0
      %335 = vdwg.mxu0
      %336 = vrot.lane.b32.xlu0 %v179, 127
      %v337 = vpop.permute.xlu0 %336
      %vm338 = vcmp.lt.s32.totalorder %v178, 15
      %v339 = vsel %vm338, 1, 0
      %vm340 = vcmp.eq.s32.totalorder %v339, 1
      %v341 = vsel %vm340, %v337, 0.0
      %s342 = scalar_lea.vmem %s1, 16
      %v343 = vld [vmem:[%s342] sm:$0xff]
      %v345 = vsel %vm189, %v343, 0
      %347 = vmatprep.subr.mxu0 0.0
      %348 = vmatpush1.msra.mxu0 %v341
      %349 = vmatprep.subr.mxu0 0.0
      %350 = vmatpush1.msra.mxu0 0.0
      %351 = vmatprep.subr.mxu0 0.0
      %352 = vmatpush1.msra.mxu0 0.0
      %353 = vmatprep.subr.mxu0 0.0
      %354 = vmatpush1.msra.mxu0 0.0
      %355 = vmatprep.subr.mxu0 0.0
      %356 = vmatpush1.msra.mxu0 0.0
      %357 = vmatprep.subr.mxu0 0.0
      %358 = vmatpush1.msra.mxu0 0.0
      %359 = vmatprep.subr.mxu0 0.0
      %360 = vmatpush1.msra.mxu0 0.0
      %361 = vmatprep.subr.mxu0 0.0
      %362 = vmatpush1.msra.mxu0 0.0
      %363 = vmatprep.subr.mxu0 0.0
      %364 = vmatpush1.msra.mxu0 0.0
      %365 = vmatprep.subr.mxu0 0.0
      %366 = vmatpush1.msra.mxu0 0.0
      %367 = vmatprep.subr.mxu0 0.0
      %368 = vmatpush1.msra.mxu0 0.0
      %369 = vmatprep.subr.mxu0 0.0
      %370 = vmatpush1.msra.mxu0 0.0
      %371 = vmatprep.subr.mxu0 0.0
      %372 = vmatpush1.msra.mxu0 0.0
      %373 = vmatprep.subr.mxu0 0.0
      %374 = vmatpush1.msra.mxu0 0.0
      %375 = vmatprep.subr.mxu0 0.0
      %376 = vmatpush1.msra.mxu0 0.0
      %377 = vmatprep.subr.mxu0 0.0
      %378 = vmatpush1.msra.mxu0 0.0
      %379 = vmatprep.subr.mxu0 0.0
      %380 = vmatpush1.msra.mxu0 0.0
      %381 = vmatprep.subr.mxu0 0.0
      %382 = vmatpush1.msra.mxu0 0.0
      %383 = vmatprep.subr.mxu0 0.0
      %384 = vmatpush1.msra.mxu0 0.0
      %385 = vmatprep.subr.mxu0 0.0
      %386 = vmatpush1.msra.mxu0 0.0
      %387 = vmatprep.subr.mxu0 0.0
      %388 = vmatpush1.msra.mxu0 0.0
      %389 = vmatprep.subr.mxu0 0.0
      %390 = vmatpush1.msra.mxu0 0.0
      %391 = vmatprep.subr.mxu0 0.0
      %392 = vmatpush1.msra.mxu0 0.0
      %393 = vmatprep.subr.mxu0 0.0
      %394 = vmatpush1.msra.mxu0 0.0
      %395 = vmatprep.subr.mxu0 0.0
      %396 = vmatpush1.msra.mxu0 0.0
      %397 = vmatprep.subr.mxu0 0.0
      %398 = vmatpush1.msra.mxu0 0.0
      %399 = vmatprep.subr.mxu0 0.0
      %400 = vmatpush1.msra.mxu0 0.0
      %401 = vmatprep.subr.mxu0 0.0
      %402 = vmatpush1.msra.mxu0 0.0
      %403 = vmatprep.subr.mxu0 0.0
      %404 = vmatpush1.msra.mxu0 0.0
      %405 = vmatprep.subr.mxu0 0.0
      %406 = vmatpush1.msra.mxu0 0.0
      %407 = vmatprep.subr.mxu0 0.0
      %408 = vmatpush1.msra.mxu0 0.0
      %409 = vmatprep.subr.mxu0 0.0
      %410 = vmatpush1.msra.mxu0 0.0
      %411 = vmatprep.mubr.f32.mxu0 0.0
      %412 = vmatmul.mubr.f32.gmra.mrb[0].mxu0 %v345
      %v413 = vpop.f32.mrb[0].mxu0
      %v414 = vadd.f32 0.0, %v413
      %v415 = vpop.f32.mrb[0].mxu0
      %416 = vdwg.mxu0
      %v417 = vadd.f32 %v333, %v414
      %vm418 = vcmp.lt.s32.totalorder %v178, 16
      %v419 = vsel %vm418, 1, 0
      %vm420 = vcmp.eq.s32.totalorder %v419, 1
      %v421 = vsel %vm420, %v417, 0.0
      %422 = vst [vmem:[%s172] sm:$0xff] %v421
      %423 = vadd.xlane.f32.xlu0 %v421
      %v424 = vpop.xlane.xlu0 %423
      %v425 = vadd.f32 %v424, 0.0
      %v426 = vmul.f32 %v421, %v421
      %427 = vadd.xlane.f32.xlu0 %v426
      %v428 = vpop.xlane.xlu0 %427
      %v429 = vadd.f32 %v428, 0.0
      %v431 = vlaneseq
      %v432 = vshrl.u32 %v431, 7
      %v433 = vsub.s32 %v178, %v432
      %v434 = vrot.slane %v425, %v433
      %v437 = vlaneseq
      %v438 = vshrl.u32 %v437, 7
      %v439 = vsub.s32 %v178, %v438
      %v440 = vrot.slane %v429, %v439
      %vm442 = vcmask 1040384
      %v443 = vsel %vm442, %v434, %v440
      %vm444 = vcmask 58368
      %445 = vst.msk [vmem:[%s176] sm:$0x3] %vm444, %v443
      %p446 = scmp.lt.s32.totalorder %s15, 1
      %s447 = scalar_select %p446, %s15, 1
      %s448 = smul.addr %s447, 8
      %s449 = scalar_lea.vmem %s2, %s448
      %p450 = scmp.lt.s32.totalorder %s15, 1
      %s451 = scalar_select %p450, %s15, 1
      %s452 = smul.addr %s451, 2
      %s453 = scalar_lea.vmem %s3, %s452
      // Predicated region
      $region29: #{residual_conv_block.3} parent=27 // pred_check
        %p454 = pneg %p80
      $region30: #{residual_conv_block.3} parent=27 // pred_check_branch
        %456 = sbr.rel (%p454) target = $region32
      $region31: #{residual_conv_block.3} parent=27 // pred_region
        _
      $region32: #{residual_conv_block.3} parent=27 // pred_fallthru
        _
      // Predicated region
      $region33: #{residual_conv_block.3} parent=27 // pred_check
        %p457 = pneg %p106
      $region34: #{residual_conv_block.3} parent=27 // pred_check_branch
        %459 = sbr.rel (%p457) target = $region36
      $region35: #{residual_conv_block.3} parent=27 // pred_region
        _
      $region36: #{residual_conv_block.3} parent=27 // pred_fallthru
        _
    $region28: #{residual_conv_block.3} parent=5 // pred_fallthru
      _
    %p460 = scmp.le.s32.totalorder 2, %s10
    // Predicated region
    $region37: #{residual_conv_block.3} parent=5 // pred_check
      %p461 = pneg %p460
    $region38: #{residual_conv_block.3} parent=5 // pred_check_branch
      %463 = sbr.rel (%p461) target = $region40
    $region39: #{residual_conv_block.3} parent=5 // pred_region
      %s464 = ssub.s32 %s10, 2
      // Predicated region
      $region41: #{residual_conv_block.3} parent=39 // pred_check
        %p465 = pneg %p86
      $region42: #{residual_conv_block.3} parent=39 // pred_check_branch
        %467 = sbr.rel (%p465) target = $region44
      $region43: #{residual_conv_block.3} parent=39 // pred_region
        %p468 = scmp.lt.s32.totalorder %s16, 1
        %s469 = scalar_select %p468, %s16, 1
        %s470 = smul.addr %s469, 8
        %s471 = scalar_lea.vmem %s2, %s470
      $region44: #{residual_conv_block.3} parent=39 // pred_fallthru
        _
      // Predicated region
      $region45: #{residual_conv_block.3} parent=39 // pred_check
        %p472 = pneg %p112
      $region46: #{residual_conv_block.3} parent=39 // pred_check_branch
        %474 = sbr.rel (%p472) target = $region48
      $region47: #{residual_conv_block.3} parent=39 // pred_region
        %p475 = scmp.lt.s32.totalorder %s16, 1
        %s476 = scalar_select %p475, %s16, 1
        %s477 = smul.addr %s476, 2
        %s478 = scalar_lea.vmem %s3, %s477
      $region48: #{residual_conv_block.3} parent=39 // pred_fallthru
        _
    $region40: #{residual_conv_block.3} parent=5 // pred_fallthru
      _
  $region6: #{residual_conv_block.3} parent=0 // loop_footer
    %s14 = sadd.s32 1, %s10
  $region7: #{residual_conv_block.3} parent=0 // loop_footer_branch
    %9 = sbr.rel target = $region3
  $region8: #{residual_conv_block.3} parent=0 // loop_exit
    _

// kernel: residual_conv_block.5
$region0: #{residual_conv_block.5}
  #allocation0 [shape = 'u32[]', space=smem, size = 0x4, offset = 0x4, fixed_abs, tag = 'smem constant byte address 0x4 - core index']
  #allocation1 [shape = 'u32[144,128]{1,0:T(1,128)}', space=vmem, size = 0x12000, scoped, tag = 'internal scratch']
  %s0 = inlined_call_operand.vmem [shape: f32[2,8,128], index: 0, kind: input, shape index: {}, may-alias: {0,4}]
  %s1 = inlined_call_operand.vmem [shape: f32[2,8,128], index: 1, kind: input, shape index: {}]
  %s2 = inlined_call_operand.vmem [shape: f32[1,8,1], index: 2, kind: input, shape index: {}]
  %s3 = inlined_call_operand.vmem [shape: f32[1,8,1], index: 3, kind: input, shape index: {}]
  %s4 = inlined_call_operand.vmem [shape: f32[2,8,128], index: 4, kind: output, shape index: {}, may-alias: {0,4}]
  %s5 = sld [smem:[#allocation0]]
  $region49: #{residual_conv_block.5} parent=0
    _
  %s7 = ssub.s32 1, %s5
  %s8 = scalar_select 0, %s7, %s5
  loop: start=0, step=1, limit=4
  $region2: #{residual_conv_block.5} parent=0 // loop_pre_header
    _
  $region3: #{residual_conv_block.5} parent=0 // loop_header
    %s10 = sphi 0, %s14
    %p11 = scmp.ge.s32.totalorder %s10, 4
    %s20 = sphi 0, %s22
    %s23 = sphi 0, %s20
    %s24 = sphi 0, %s23
    %s40 = sphi 0, %s24
    %s46 = sphi 0, %s48
    %s49 = sphi 0, %s46
    %s50 = sphi 0, %s49
    %s66 = sphi 0, %s50
    %s70 = sphi 0, %s70
    %s72 = sphi 0, %s70
    %s73 = sphi 0, %s72
    %s87 = sphi 0, %s73
    %s91 = sphi 0, %s91
    %s93 = sphi 0, %s91
    %s94 = sphi 0, %s93
    %s108 = sphi 0, %s94
    %s114 = sphi 0, %s116
    %s117 = sphi 0, %s114
    %s118 = sphi 0, %s117
    %s134 = sphi 0, %s118
  $region4: #{residual_conv_block.5} parent=0 // loop_header_branch
    %13 = sbr.rel (%p11) target = $region8
  $region5: #{residual_conv_block.5} parent=0 // loop_body
    %s15 = ssub.s32 %s10, 1
    %s16 = ssub.s32 %s10, 2
    %s17 = sadd.s32 %s10, 1
    %s18 = ssub.s32 %s10, %s17
    %p19 = scmp.eq.s32.totalorder %s18, 0
    %s21 = sadd.s32 %s20, 1
    %s22 = scalar_select %p19, %s20, %s21
    %p25 = pneg %p19
    %p26 = scmp.eq.s32.totalorder %s10, 1
    %p27 = por %p25, %p26
    %p28 = scmp.ne.s32.totalorder %s20, %s23
    %p29 = scmp.eq.s32.totalorder %s10, 0
    %p30 = por %p28, %p29
    %p31 = scmp.ne.s32.totalorder %s20, %s23
    %p32 = scmp.eq.s32.totalorder %s15, 1
    %p33 = por %p31, %p32
    %p34 = scmp.ne.s32.totalorder %s23, %s24
    %p35 = scmp.eq.s32.totalorder %s15, 0
    %p36 = por %p34, %p35
    %p37 = scmp.ne.s32.totalorder %s23, %s24
    %p38 = scmp.eq.s32.totalorder %s16, 1
    %p39 = por %p37, %p38
    %p41 = scmp.ne.s32.totalorder %s24, %s40
    %p42 = scmp.eq.s32.totalorder %s16, 0
    %p43 = por %p41, %p42
    %s44 = ssub.s32 %s10, %s17
    %p45 = scmp.eq.s32.totalorder %s44, 0
    %s47 = sadd.s32 %s46, 1
    %s48 = scalar_select %p45, %s46, %s47
    %p51 = pneg %p45
    %p52 = scmp.eq.s32.totalorder %s10, 1
    %p53 = por %p51, %p52
    %p54 = scmp.ne.s32.totalorder %s46, %s49
    %p55 = scmp.eq.s32.totalorder %s10, 0
    %p56 = por %p54, %p55
    %p57 = scmp.ne.s32.totalorder %s46, %s49
    %p58 = scmp.eq.s32.totalorder %s15, 1
    %p59 = por %p57, %p58
    %p60 = scmp.ne.s32.totalorder %s49, %s50
    %p61 = scmp.eq.s32.totalorder %s15, 0
    %p62 = por %p60, %p61
    %p63 = scmp.ne.s32.totalorder %s49, %s50
    %p64 = scmp.eq.s32.totalorder %s16, 1
    %p65 = por %p63, %p64
    %p67 = scmp.ne.s32.totalorder %s50, %s66
    %p68 = scmp.eq.s32.totalorder %s16, 0
    %p69 = por %p67, %p68
    %s71 = sadd.s32 %s70, 1
    %p74 = scmp.eq.s32.totalorder %s10, 1
    %p75 = scmp.ne.s32.totalorder %s70, %s72
    %p76 = scmp.eq.s32.totalorder %s10, 0
    %p77 = por %p75, %p76
    %p78 = scmp.ne.s32.totalorder %s70, %s72
    %p79 = scmp.eq.s32.totalorder %s15, 1
    %p80 = por %p78, %p79
    %p81 = scmp.ne.s32.totalorder %s72, %s73
    %p82 = scmp.eq.s32.totalorder %s15, 0
    %p83 = por %p81, %p82
    %p84 = scmp.ne.s32.totalorder %s72, %s73
    %p85 = scmp.eq.s32.totalorder %s16, 1
    %p86 = por %p84, %p85
    %p88 = scmp.ne.s32.totalorder %s73, %s87
    %p89 = scmp.eq.s32.totalorder %s16, 0
    %p90 = por %p88, %p89
    %s92 = sadd.s32 %s91, 1
    %p95 = scmp.eq.s32.totalorder %s10, 1
    %p96 = scmp.ne.s32.totalorder %s91, %s93
    %p97 = scmp.eq.s32.totalorder %s10, 0
    %p98 = por %p96, %p97
    %p99 = scmp.ne.s32.totalorder %s91, %s93
    %p100 = scmp.eq.s32.totalorder %s15, 1
    %p101 = por %p99, %p100
    %p102 = scmp.ne.s32.totalorder %s93, %s94
    %p103 = scmp.eq.s32.totalorder %s15, 0
    %p104 = por %p102, %p103
    %p105 = scmp.ne.s32.totalorder %s93, %s94
    %p106 = scmp.eq.s32.totalorder %s16, 1
    %p107 = por %p105, %p106
    %p109 = scmp.ne.s32.totalorder %s94, %s108
    %p110 = scmp.eq.s32.totalorder %s16, 0
    %p111 = por %p109, %p110
    %s112 = ssub.s32 %s10, %s17
    %p113 = scmp.eq.s32.totalorder %s112, 0
    %s115 = sadd.s32 %s114, 1
    %s116 = scalar_select %p113, %s114, %s115
    %p119 = pneg %p113
    %p120 = scmp.eq.s32.totalorder %s10, 1
    %p121 = por %p119, %p120
    %p122 = scmp.ne.s32.totalorder %s114, %s117
    %p123 = scmp.eq.s32.totalorder %s10, 0
    %p124 = por %p122, %p123
    %p125 = scmp.ne.s32.totalorder %s114, %s117
    %p126 = scmp.eq.s32.totalorder %s15, 1
    %p127 = por %p125, %p126
    %p128 = scmp.ne.s32.totalorder %s117, %s118
    %p129 = scmp.eq.s32.totalorder %s15, 0
    %p130 = por %p128, %p129
    %p131 = scmp.ne.s32.totalorder %s117, %s118
    %p132 = scmp.eq.s32.totalorder %s16, 1
    %p133 = por %p131, %p132
    %p135 = scmp.ne.s32.totalorder %s118, %s134
    %p136 = scmp.eq.s32.totalorder %s16, 0
    %p137 = por %p135, %p136
    %p138 = scmp.le.s32.totalorder 1, %s10
    %p139 = scmp.lt.s32.totalorder %s10, 3
    %p140 = pnand %p138, %p139
    %p141 = pneg %p140
    // Predicated region
    $region9: #{residual_conv_block.5} parent=5 // pred_check
      _
    $region10: #{residual_conv_block.5} parent=5 // pred_check_branch
      %143 = sbr.rel (%p140) target = $region12
    $region11: #{residual_conv_block.5} parent=5 // pred_region
      %s144 = ssub.s32 %s10, 1
      // Predicated region
      $region13: #{residual_conv_block.5} parent=11 // pred_check
        %p145 = pneg %p83
      $region14: #{residual_conv_block.5} parent=11 // pred_check_branch
        %147 = sbr.rel (%p145) target = $region16
      $region15: #{residual_conv_block.5} parent=11 // pred_region
        _
      $region16: #{residual_conv_block.5} parent=11 // pred_fallthru
        _
      // Predicated region
      $region17: #{residual_conv_block.5} parent=11 // pred_check
        %p148 = pneg %p104
      $region18: #{residual_conv_block.5} parent=11 // pred_check_branch
        %150 = sbr.rel (%p148) target = $region20
      $region19: #{residual_conv_block.5} parent=11 // pred_region
        _
      $region20: #{residual_conv_block.5} parent=11 // pred_fallthru
        _
    $region12: #{residual_conv_block.5} parent=5 // pred_fallthru
      _
    %p151 = scmp.lt.s32.totalorder %s10, 2
    // Predicated region
    $region21: #{residual_conv_block.5} parent=5 // pred_check
      %p152 = pneg %p151
    $region22: #{residual_conv_block.5} parent=5 // pred_check_branch
      %154 = sbr.rel (%p152) target = $region24
    $region23: #{residual_conv_block.5} parent=5 // pred_region
      // Predicated region
      $region25: #{residual_conv_block.5} parent=23 // pred_check
        %p155 = pneg %p30
      $region26: #{residual_conv_block.5} parent=23 // pred_check_branch
        %157 = sbr.rel (%p155) target = $region28
      $region27: #{residual_conv_block.5} parent=23 // pred_region
        %p158 = scmp.lt.s32.totalorder %s10, 1
        %s159 = scalar_select %p158, %s10, 1
        %s160 = smul.addr %s159, 8
        %s161 = scalar_lea.vmem %s0, %s160
      $region28: #{residual_conv_block.5} parent=23 // pred_fallthru
        _
      // Predicated region
      $region29: #{residual_conv_block.5} parent=23 // pred_check
        %p162 = pneg %p56
      $region30: #{residual_conv_block.5} parent=23 // pred_check_branch
        %164 = sbr.rel (%p162) target = $region32
      $region31: #{residual_conv_block.5} parent=23 // pred_region
        %p165 = scmp.lt.s32.totalorder %s10, 1
        %s166 = scalar_select %p165, %s10, 1
        %s167 = smul.addr %s166, 8
        %s168 = scalar_lea.vmem %s1, %s167
      $region32: #{residual_conv_block.5} parent=23 // pred_fallthru
        _
    $region24: #{residual_conv_block.5} parent=5 // pred_fallthru
      _
    %p169 = scmp.le.s32.totalorder 1, %s10
    %p170 = scmp.lt.s32.totalorder %s10, 3
    %p171 = pnand %p169, %p170
    %p172 = pneg %p171
    // Predicated region
    $region33: #{residual_conv_block.5} parent=5 // pred_check
      _
    $region34: #{residual_conv_block.5} parent=5 // pred_check_branch
      %174 = sbr.rel (%p171) target = $region36
    $region35: #{residual_conv_block.5} parent=5 // pred_region
      %s175 = ssub.s32 %s10, 1
      %p176 = scmp.lt.s32.totalorder %s15, 1
      %s177 = scalar_select %p176, %s15, 1
      %s178 = smul.addr %s177, 8
      %s179 = scalar_lea.vmem %s0, %s178
      %p180 = pneg %p36
      %p181 = pneg %p33
      %p182 = scmp.lt.s32.totalorder %s15, 1
      %s183 = scalar_select %p182, %s15, 1
      %s184 = smul.addr %s183, 8
      %s185 = scalar_lea.vmem %s1, %s184
      %p186 = pneg %p62
      %p187 = pneg %p59
      %p188 = pneg %p83
      %p189 = pneg %p80
      %p190 = pneg %p104
      %p191 = pneg %p101
      %p192 = pneg %p130
      %p193 = pneg %p127
      %p194 = scmp.lt.s32.totalorder %s15, 1
      %s195 = scalar_select %p194, %s15, 1
      %s196 = smul.addr %s195, 8
      %s197 = scalar_lea.vmem %s4, %s196
      %p198 = scmp.lt.s32.totalorder %s15, 1
      %s199 = scalar_select %p198, %s15, 1
      %s200 = smul.addr %s199, 8
      %s201 = scalar_lea.vmem %s0, %s200
      %p202 = scmp.lt.s32.totalorder %s15, 1
      %s203 = scalar_select %p202, %s15, 1
      %s204 = smul.addr %s203, 8
      %s205 = scalar_lea.vmem %s1, %s204
      %p206 = scmp.lt.s32.totalorder %s15, 1
      %s207 = scalar_select %p206, %s15, 1
      %s208 = smul.addr %s207, 8
      %s209 = scalar_lea.vmem %s4, %s208
      %v210 = vld [vmem:[%s201] sm:$0xff]
      %v211 = vld [vmem:[%s2] sm:$0xff]
      %213 = vset.pattern.permute.xlu0 0
      %214 = vperm.xlu0 %213, %v211
      %v215 = vpop.permute.xlu0 %214
      %v217 = vmul.f32 %v210, %v215
      %v218 = vld [vmem:[%s3] sm:$0xff]
      %220 = vset.pattern.permute.xlu0 0
      %221 = vperm.xlu0 %220, %v218
      %v222 = vpop.permute.xlu0 %221
      %v224 = vadd.f32 %v217, %v222
      %v225 = vld [vmem:[%s205] sm:$0xff]
      %v226 = vadd.f32 %v224, %v225
      %v227 = vmul.f32 %v226, 0.5
      %v228 = vmul.f32 %v226, 0.70710677
      %v229 = vand.u32 2147483647, %v228
      %v230 = vmul.f32 %v229, 0.3275911
      %v231 = vadd.f32 %v230, 1.0
      %v232 = vrcp.pop %v231
      %v233 = vmul.f32 %v231, %v232
      %v234 = vsub.f32 2.0, %v233
      %v235 = vmul.f32 %v232, %v234
      %v236 = vmul.f32 %v235, 1.0614054
      %v237 = vadd.f32 %v236, -1.4531521
      %v238 = vmul.f32 %v237, %v235
      %v239 = vadd.f32 %v238, 1.4214138
      %v240 = vmul.f32 %v239, %v235
      %v241 = vadd.f32 %v240, -0.28449672
      %v242 = vmul.f32 %v241, %v235
      %v243 = vadd.f32 %v242, 0.2548296
      %v244 = vmul.f32 %v243, %v235
      %v245 = vsub.f32 0.0, %v229
      %v246 = vmul.f32 %v245, %v229
      %v247 = vmul.f32 %v246, 1.442695
      %v248 = vpow.pop %v247
      %v249 = vmul.f32 %v244, %v248
      %v250 = vsub.f32 1.0, %v249
      %vm251 = vcmp.ge.f32.partialorder %v228, 0.0
      %v252 = vsub.f32 0.0, %v250
      %v253 = vsel %vm251, %v250, %v252
      %v254 = vadd.f32 %v253, 1.0
      %v255 = vmul.f32 %v227, %v254
      %256 = vst [vmem:[%s209] sm:$0xff] %v255
      %p257 = scmp.lt.s32.totalorder %s15, 1
      %s258 = scalar_select %p257, %s15, 1
      %s259 = smul.addr %s258, 8
      %s260 = scalar_lea.vmem %s4, %s259
      // Predicated region
      $region37: #{residual_conv_block.5} parent=35 // pred_check
        %p261 = pneg %p127
      $region38: #{residual_conv_block.5} parent=35 // pred_check_branch
        %263 = sbr.rel (%p261) target = $region40
      $region39: #{residual_conv_block.5} parent=35 // pred_region
        _
      $region40: #{residual_conv_block.5} parent=35 // pred_fallthru
        _
    $region36: #{residual_conv_block.5} parent=5 // pred_fallthru
      _
    %p264 = scmp.le.s32.totalorder 2, %s10
    // Predicated region
    $region41: #{residual_conv_block.5} parent=5 // pred_check
      %p265 = pneg %p264
    $region42: #{residual_conv_block.5} parent=5 // pred_check_branch
      %267 = sbr.rel (%p265) target = $region44
    $region43: #{residual_conv_block.5} parent=5 // pred_region
      %s268 = ssub.s32 %s10, 2
      // Predicated region
      $region45: #{residual_conv_block.5} parent=43 // pred_check
        %p269 = pneg %p133
      $region46: #{residual_conv_block.5} parent=43 // pred_check_branch
        %271 = sbr.rel (%p269) target = $region48
      $region47: #{residual_conv_block.5} parent=43 // pred_region
        %p272 = scmp.lt.s32.totalorder %s16, 1
        %s273 = scalar_select %p272, %s16, 1
        %s274 = smul.addr %s273, 8
        %s275 = scalar_lea.vmem %s4, %s274
      $region48: #{residual_conv_block.5} parent=43 // pred_fallthru
        _
    $region44: #{residual_conv_block.5} parent=5 // pred_fallthru
      _
  $region6: #{residual_conv_block.5} parent=0 // loop_footer
    %s14 = sadd.s32 1, %s10
  $region7: #{residual_conv_block.5} parent=0 // loop_footer_branch
    %9 = sbr.rel target = $region3
  $region8: #{residual_conv_block.5} parent=0 // loop_exit
    _

// kernel: residual_conv_block.4
$region0: #{residual_conv_block.4}
  #allocation0 [shape = 'u32[]', space=smem, size = 0x4, offset = 0x4, fixed_abs, tag = 'smem constant byte address 0x4 - core index']
  #allocation1 [shape = 'u32[144,128]{1,0:T(1,128)}', space=vmem, size = 0x12000, scoped, tag = 'internal scratch']
  %s0 = inlined_call_operand.vmem [shape: f32[2,8,128], index: 0, kind: input, shape index: {}, may-alias: {0,4}]
  %s1 = inlined_call_operand.vmem [shape: f32[3,8,8], index: 1, kind: input, shape index: {}]
  %s2 = inlined_call_operand.vmem [shape: f32[1,8,1], index: 2, kind: input, shape index: {}]
  %s3 = inlined_call_operand.vmem [shape: f32[1,8,1], index: 3, kind: input, shape index: {}]
  %s4 = inlined_call_operand.vmem [shape: f32[2,8,128], index: 4, kind: output, shape index: {0}, may-alias: {0,4}]
  %s5 = inlined_call_operand.vmem [shape: f32[2,2,8], index: 5, kind: output, shape index: {1}]
  %6 = xla_tuple %s4, %s5
  %s7 = sld [smem:[#allocation0]]
  $region57: #{residual_conv_block.4} parent=0
    _
  %s9 = ssub.s32 1, %s7
  %s10 = scalar_select 0, %s9, %s7
  loop: start=0, step=1, limit=4
  $region2: #{residual_conv_block.4} parent=0 // loop_pre_header
    _
  $region3: #{residual_conv_block.4} parent=0 // loop_header
    %s12 = sphi 0, %s16
    %p13 = scmp.ge.s32.totalorder %s12, 4
    %s22 = sphi 0, %s24
    %s25 = sphi 0, %s22
    %s26 = sphi 0, %s25
    %s42 = sphi 0, %s26
    %s46 = sphi 0, %s46
    %s48 = sphi 0, %s46
    %s49 = sphi 0, %s48
    %s63 = sphi 0, %s49
    %s67 = sphi 0, %s67
    %s69 = sphi 0, %s67
    %s70 = sphi 0, %s69
    %s84 = sphi 0, %s70
    %s88 = sphi 0, %s88
    %s90 = sphi 0, %s88
    %s91 = sphi 0, %s90
    %s105 = sphi 0, %s91
    %s111 = sphi 0, %s113
    %s114 = sphi 0, %s111
    %s115 = sphi 0, %s114
    %s131 = sphi 0, %s115
    %s137 = sphi 0, %s139
    %s140 = sphi 0, %s137
    %s141 = sphi 0, %s140
    %s157 = sphi 0, %s141
  $region4: #{residual_conv_block.4} parent=0 // loop_header_branch
    %15 = sbr.rel (%p13) target = $region8
  $region5: #{residual_conv_block.4} parent=0 // loop_body
    %s17 = ssub.s32 %s12, 1
    %s18 = ssub.s32 %s12, 2
    %s19 = sadd.s32 %s12, 1
    %s20 = ssub.s32 %s12, %s19
    %p21 = scmp.eq.s32.totalorder %s20, 0
    %s23 = sadd.s32 %s22, 1
    %s24 = scalar_select %p21, %s22, %s23
    %p27 = pneg %p21
    %p28 = scmp.eq.s32.totalorder %s12, 1
    %p29 = por %p27, %p28
    %p30 = scmp.ne.s32.totalorder %s22, %s25
    %p31 = scmp.eq.s32.totalorder %s12, 0
    %p32 = por %p30, %p31
    %p33 = scmp.ne.s32.totalorder %s22, %s25
    %p34 = scmp.eq.s32.totalorder %s17, 1
    %p35 = por %p33, %p34
    %p36 = scmp.ne.s32.totalorder %s25, %s26
    %p37 = scmp.eq.s32.totalorder %s17, 0
    %p38 = por %p36, %p37
    %p39 = scmp.ne.s32.totalorder %s25, %s26
    %p40 = scmp.eq.s32.totalorder %s18, 1
    %p41 = por %p39, %p40
    %p43 = scmp.ne.s32.totalorder %s26, %s42
    %p44 = scmp.eq.s32.totalorder %s18, 0
    %p45 = por %p43, %p44
    %s47 = sadd.s32 %s46, 1
    %p50 = scmp.eq.s32.totalorder %s12, 1
    %p51 = scmp.ne.s32.totalorder %s46, %s48
    %p52 = scmp.eq.s32.totalorder %s12, 0
    %p53 = por %p51, %p52
    %p54 = scmp.ne.s32.totalorder %s46, %s48
    %p55 = scmp.eq.s32.totalorder %s17, 1
    %p56 = por %p54, %p55
    %p57 = scmp.ne.s32.totalorder %s48, %s49
    %p58 = scmp.eq.s32.totalorder %s17, 0
    %p59 = por %p57, %p58
    %p60 = scmp.ne.s32.totalorder %s48, %s49
    %p61 = scmp.eq.s32.totalorder %s18, 1
    %p62 = por %p60, %p61
    %p64 = scmp.ne.s32.totalorder %s49, %s63
    %p65 = scmp.eq.s32.totalorder %s18, 0
    %p66 = por %p64, %p65
    %s68 = sadd.s32 %s67, 1
    %p71 = scmp.eq.s32.totalorder %s12, 1
    %p72 = scmp.ne.s32.totalorder %s67, %s69
    %p73 = scmp.eq.s32.totalorder %s12, 0
    %p74 = por %p72, %p73
    %p75 = scmp.ne.s32.totalorder %s67, %s69
    %p76 = scmp.eq.s32.totalorder %s17, 1
    %p77 = por %p75, %p76
    %p78 = scmp.ne.s32.totalorder %s69, %s70
    %p79 = scmp.eq.s32.totalorder %s17, 0
    %p80 = por %p78, %p79
    %p81 = scmp.ne.s32.totalorder %s69, %s70
    %p82 = scmp.eq.s32.totalorder %s18, 1
    %p83 = por %p81, %p82
    %p85 = scmp.ne.s32.totalorder %s70, %s84
    %p86 = scmp.eq.s32.totalorder %s18, 0
    %p87 = por %p85, %p86
    %s89 = sadd.s32 %s88, 1
    %p92 = scmp.eq.s32.totalorder %s12, 1
    %p93 = scmp.ne.s32.totalorder %s88, %s90
    %p94 = scmp.eq.s32.totalorder %s12, 0
    %p95 = por %p93, %p94
    %p96 = scmp.ne.s32.totalorder %s88, %s90
    %p97 = scmp.eq.s32.totalorder %s17, 1
    %p98 = por %p96, %p97
    %p99 = scmp.ne.s32.totalorder %s90, %s91
    %p100 = scmp.eq.s32.totalorder %s17, 0
    %p101 = por %p99, %p100
    %p102 = scmp.ne.s32.totalorder %s90, %s91
    %p103 = scmp.eq.s32.totalorder %s18, 1
    %p104 = por %p102, %p103
    %p106 = scmp.ne.s32.totalorder %s91, %s105
    %p107 = scmp.eq.s32.totalorder %s18, 0
    %p108 = por %p106, %p107
    %s109 = ssub.s32 %s12, %s19
    %p110 = scmp.eq.s32.totalorder %s109, 0
    %s112 = sadd.s32 %s111, 1
    %s113 = scalar_select %p110, %s111, %s112
    %p116 = pneg %p110
    %p117 = scmp.eq.s32.totalorder %s12, 1
    %p118 = por %p116, %p117
    %p119 = scmp.ne.s32.totalorder %s111, %s114
    %p120 = scmp.eq.s32.totalorder %s12, 0
    %p121 = por %p119, %p120
    %p122 = scmp.ne.s32.totalorder %s111, %s114
    %p123 = scmp.eq.s32.totalorder %s17, 1
    %p124 = por %p122, %p123
    %p125 = scmp.ne.s32.totalorder %s114, %s115
    %p126 = scmp.eq.s32.totalorder %s17, 0
    %p127 = por %p125, %p126
    %p128 = scmp.ne.s32.totalorder %s114, %s115
    %p129 = scmp.eq.s32.totalorder %s18, 1
    %p130 = por %p128, %p129
    %p132 = scmp.ne.s32.totalorder %s115, %s131
    %p133 = scmp.eq.s32.totalorder %s18, 0
    %p134 = por %p132, %p133
    %s135 = ssub.s32 %s12, %s19
    %p136 = scmp.eq.s32.totalorder %s135, 0
    %s138 = sadd.s32 %s137, 1
    %s139 = scalar_select %p136, %s137, %s138
    %p142 = pneg %p136
    %p143 = scmp.eq.s32.totalorder %s12, 1
    %p144 = por %p142, %p143
    %p145 = scmp.ne.s32.totalorder %s137, %s140
    %p146 = scmp.eq.s32.totalorder %s12, 0
    %p147 = por %p145, %p146
    %p148 = scmp.ne.s32.totalorder %s137, %s140
    %p149 = scmp.eq.s32.totalorder %s17, 1
    %p150 = por %p148, %p149
    %p151 = scmp.ne.s32.totalorder %s140, %s141
    %p152 = scmp.eq.s32.totalorder %s17, 0
    %p153 = por %p151, %p152
    %p154 = scmp.ne.s32.totalorder %s140, %s141
    %p155 = scmp.eq.s32.totalorder %s18, 1
    %p156 = por %p154, %p155
    %p158 = scmp.ne.s32.totalorder %s141, %s157
    %p159 = scmp.eq.s32.totalorder %s18, 0
    %p160 = por %p158, %p159
    %p161 = scmp.le.s32.totalorder 1, %s12
    %p162 = scmp.lt.s32.totalorder %s12, 3
    %p163 = pnand %p161, %p162
    %p164 = pneg %p163
    // Predicated region
    $region9: #{residual_conv_block.4} parent=5 // pred_check
      _
    $region10: #{residual_conv_block.4} parent=5 // pred_check_branch
      %166 = sbr.rel (%p163) target = $region12
    $region11: #{residual_conv_block.4} parent=5 // pred_region
      %s167 = ssub.s32 %s12, 1
      // Predicated region
      $region13: #{residual_conv_block.4} parent=11 // pred_check
        %p168 = pneg %p59
      $region14: #{residual_conv_block.4} parent=11 // pred_check_branch
        %170 = sbr.rel (%p168) target = $region16
      $region15: #{residual_conv_block.4} parent=11 // pred_region
        _
      $region16: #{residual_conv_block.4} parent=11 // pred_fallthru
        _
      // Predicated region
      $region17: #{residual_conv_block.4} parent=11 // pred_check
        %p171 = pneg %p80
      $region18: #{residual_conv_block.4} parent=11 // pred_check_branch
        %173 = sbr.rel (%p171) target = $region20
      $region19: #{residual_conv_block.4} parent=11 // pred_region
        _
      $region20: #{residual_conv_block.4} parent=11 // pred_fallthru
        _
      // Predicated region
      $region21: #{residual_conv_block.4} parent=11 // pred_check
        %p174 = pneg %p101
      $region22: #{residual_conv_block.4} parent=11 // pred_check_branch
        %176 = sbr.rel (%p174) target = $region24
      $region23: #{residual_conv_block.4} parent=11 // pred_region
        _
      $region24: #{residual_conv_block.4} parent=11 // pred_fallthru
        _
    $region12: #{residual_conv_block.4} parent=5 // pred_fallthru
      _
    %p177 = scmp.lt.s32.totalorder %s12, 2
    // Predicated region
    $region25: #{residual_conv_block.4} parent=5 // pred_check
      %p178 = pneg %p177
    $region26: #{residual_conv_block.4} parent=5 // pred_check_branch
      %180 = sbr.rel (%p178) target = $region28
    $region27: #{residual_conv_block.4} parent=5 // pred_region
      // Predicated region
      $region29: #{residual_conv_block.4} parent=27 // pred_check
        %p181 = pneg %p32
      $region30: #{residual_conv_block.4} parent=27 // pred_check_branch
        %183 = sbr.rel (%p181) target = $region32
      $region31: #{residual_conv_block.4} parent=27 // pred_region
        %p184 = scmp.lt.s32.totalorder %s12, 1
        %s185 = scalar_select %p184, %s12, 1
        %s186 = smul.addr %s185, 8
        %s187 = scalar_lea.vmem %s0, %s186
      $region32: #{residual_conv_block.4} parent=27 // pred_fallthru
        _
    $region28: #{residual_conv_block.4} parent=5 // pred_fallthru
      _
    %p188 = scmp.le.s32.totalorder 1, %s12
    %p189 = scmp.lt.s32.totalorder %s12, 3
    %p190 = pnand %p188, %p189
    %p191 = pneg %p190
    // Predicated region
    $region33: #{residual_conv_block.4} parent=5 // pred_check
      _
    $region34: #{residual_conv_block.4} parent=5 // pred_check_branch
      %193 = sbr.rel (%p190) target = $region36
    $region35: #{residual_conv_block.4} parent=5 // pred_region
      %s194 = ssub.s32 %s12, 1
      %p195 = scmp.lt.s32.totalorder %s17, 1
      %s196 = scalar_select %p195, %s17, 1
      %s197 = smul.addr %s196, 8
      %s198 = scalar_lea.vmem %s0, %s197
      %p199 = pneg %p38
      %p200 = pneg %p35
      %p201 = pneg %p59
      %p202 = pneg %p56
      %p203 = pneg %p80
      %p204 = pneg %p77
      %p205 = pneg %p101
      %p206 = pneg %p98
      %p207 = pneg %p127
      %p208 = pneg %p124
      %p209 = scmp.lt.s32.totalorder %s17, 1
      %s210 = scalar_select %p209, %s17, 1
      %s211 = smul.addr %s210, 8
      %s212 = scalar_lea.vmem %s4, %s211
      %p213 = pneg %p153
      %p214 = pneg %p150
      %p215 = scmp.lt.s32.totalorder %s17, 1
      %s216 = scalar_select %p215, %s17, 1
      %s217 = smul.addr %s216, 2
      %s218 = scalar_lea.vmem %s5, %s217
      %p219 = scmp.lt.s32.totalorder %s17, 1
      %s220 = scalar_select %p219, %s17, 1
      %s221 = smul.addr %s220, 8
      %s222 = scalar_lea.vmem %s0, %s221
      %p223 = scmp.lt.s32.totalorder %s17, 1
      %s224 = scalar_select %p223, %s17, 1
      %s225 = smul.addr %s224, 8
      %s226 = scalar_lea.vmem %s4, %s225
      %p227 = scmp.lt.s32.totalorder %s17, 1
      %s228 = scalar_select %p227, %s17, 1
      %s229 = smul.addr %s228, 2
      %s230 = scalar_lea.vmem %s5, %s229
      %v231 = vlaneseq
      %v232 = vand.u32 %v231, 127
      %v233 = vld [vmem:[%s222] sm:$0xff]
      %v234 = vld [vmem:[%s2] sm:$0xff]
      %236 = vset.pattern.permute.xlu0 0
      %237 = vperm.xlu0 %236, %v234
      %v238 = vpop.permute.xlu0 %237
      %v240 = vmul.f32 %v233, %v238
      %v241 = vld [vmem:[%s3] sm:$0xff]
      %243 = vset.pattern.permute.xlu0 0
      %244 = vperm.xlu0 %243, %v241
      %v245 = vpop.permute.xlu0 %244
      %v247 = vadd.f32 %v240, %v245
      %v248 = vmul.f32 %v247, 0.5
      %v249 = vmul.f32 %v247, 0.70710677
      %v250 = vand.u32 2147483647, %v249
      %v251 = vmul.f32 %v250, 0.3275911
      %v252 = vadd.f32 %v251, 1.0
      %v253 = vrcp.pop %v252
      %v254 = vmul.f32 %v252, %v253
      %v255 = vsub.f32 2.0, %v254
      %v256 = vmul.f32 %v253, %v255
      %v257 = vmul.f32 %v256, 1.0614054
      %v258 = vadd.f32 %v257, -1.4531521
      %v259 = vmul.f32 %v258, %v256
      %v260 = vadd.f32 %v259, 1.4214138
      %v261 = vmul.f32 %v260, %v256
      %v262 = vadd.f32 %v261, -0.28449672
      %v263 = vmul.f32 %v262, %v256
      %v264 = vadd.f32 %v263, 0.2548296
      %v265 = vmul.f32 %v264, %v256
      %v266 = vsub.f32 0.0, %v250
      %v267 = vmul.f32 %v266, %v250
      %v268 = vmul.f32 %v267, 1.442695
      %v269 = vpow.pop %v268
      %v270 = vmul.f32 %v265, %v269
      %v271 = vsub.f32 1.0, %v270
      %vm272 = vcmp.ge.f32.partialorder %v249, 0.0
      %v273 = vsub.f32 0.0, %v271
      %v274 = vsel %vm272, %v271, %v273
      %v275 = vadd.f32 %v274, 1.0
      %v276 = vmul.f32 %v248, %v275
      %vm277 = vcmp.lt.s32.totalorder %v232, 16
      %v278 = vsel %vm277, 1, 0
      %vm279 = vcmp.eq.s32.totalorder %v278, 1
      %v280 = vsel %vm279, %v276, 0.0
      %281 = vrot.lane.b32.xlu0 %v280, 1
      %v282 = vpop.permute.xlu0 %281
      %vm283 = vcmp.ge.s32.totalorder %v232, 1
      %v284 = vsel %vm283, 1, 0
      %vm285 = vcmp.eq.s32.totalorder %v284, 1
      %v286 = vsel %vm285, %v282, 0.0
      %v287 = vld [vmem:[%s1] sm:$0xff]
      %s288 = scalar_lea.vmem %s1, 8
      %v289 = vld [vmem:[%s288] sm:$0xff]
      %vm290 = vcmask 64512
      %v292 = vsel %vm290, %v289, 0
      %294 = vmatprep.subr.mxu0 0.0
      %295 = vmatpush1.msra.mxu0 %v280
      %296 = vmatprep.subr.mxu0 0.0
      %297 = vmatpush1.msra.mxu0 0.0
      %298 = vmatprep.subr.mxu0 0.0
      %299 = vmatpush1.msra.mxu0 0.0
      %300 = vmatprep.subr.mxu0 0.0
      %301 = vmatpush1.msra.mxu0 0.0
      %302 = vmatprep.subr.mxu0 0.0
      %303 = vmatpush1.msra.mxu0 0.0
      %304 = vmatprep.subr.mxu0 0.0
      %305 = vmatpush1.msra.mxu0 0.0
      %306 = vmatprep.subr.mxu0 0.0
      %307 = vmatpush1.msra.mxu0 0.0
      %308 = vmatprep.subr.mxu0 0.0
      %309 = vmatpush1.msra.mxu0 0.0
      %310 = vmatprep.subr.mxu0 0.0
      %311 = vmatpush1.msra.mxu0 0.0
      %312 = vmatprep.subr.mxu0 0.0
      %313 = vmatpush1.msra.mxu0 0.0
      %314 = vmatprep.subr.mxu0 0.0
      %315 = vmatpush1.msra.mxu0 0.0
      %316 = vmatprep.subr.mxu0 0.0
      %317 = vmatpush1.msra.mxu0 0.0
      %318 = vmatprep.subr.mxu0 0.0
      %319 = vmatpush1.msra.mxu0 0.0
      %320 = vmatprep.subr.mxu0 0.0
      %321 = vmatpush1.msra.mxu0 0.0
      %322 = vmatprep.subr.mxu0 0.0
      %323 = vmatpush1.msra.mxu0 0.0
      %324 = vmatprep.subr.mxu0 0.0
      %325 = vmatpush1.msra.mxu0 0.0
      %326 = vmatprep.subr.mxu0 0.0
      %327 = vmatpush1.msra.mxu0 0.0
      %328 = vmatprep.subr.mxu0 0.0
      %329 = vmatpush1.msra.mxu0 0.0
      %330 = vmatprep.subr.mxu0 0.0
      %331 = vmatpush1.msra.mxu0 0.0
      %332 = vmatprep.subr.mxu0 0.0
      %333 = vmatpush1.msra.mxu0 0.0
      %334 = vmatprep.subr.mxu0 0.0
      %335 = vmatpush1.msra.mxu0 0.0
      %336 = vmatprep.subr.mxu0 0.0
      %337 = vmatpush1.msra.mxu0 0.0
      %338 = vmatprep.subr.mxu0 0.0
      %339 = vmatpush1.msra.mxu0 0.0
      %340 = vmatprep.subr.mxu0 0.0
      %341 = vmatpush1.msra.mxu0 0.0
      %342 = vmatprep.subr.mxu0 0.0
      %343 = vmatpush1.msra.mxu0 0.0
      %344 = vmatprep.subr.mxu0 0.0
      %345 = vmatpush1.msra.mxu0 0.0
      %346 = vmatprep.subr.mxu0 0.0
      %347 = vmatpush1.msra.mxu0 0.0
      %348 = vmatprep.subr.mxu0 0.0
      %349 = vmatpush1.msra.mxu0 0.0
      %350 = vmatprep.subr.mxu0 0.0
      %351 = vmatpush1.msra.mxu0 0.0
      %352 = vmatprep.subr.mxu0 0.0
      %353 = vmatpush1.msra.mxu0 0.0
      %354 = vmatprep.subr.mxu0 0.0
      %355 = vmatpush1.msra.mxu0 0.0
      %356 = vmatprep.subr.mxu0 0.0
      %357 = vmatpush1.msra.mxu0 0.0
      %358 = vmatprep.mubr.f32.mxu0 0.0
      %359 = vmatmul.mubr.f32.gmra.mrb[0].mxu0 %v292
      %v360 = vpop.f32.mrb[0].mxu0
      %v361 = vadd.f32 0.0, %v360
      %v362 = vpop.f32.mrb[0].mxu0
      %363 = vdwg.mxu0
      %v365 = vsel %vm290, %v287, 0
      %367 = vmatprep.subr.mxu0 0.0
      %368 = vmatpush1.msra.mxu0 %v286
      %369 = vmatprep.subr.mxu0 0.0
      %370 = vmatpush1.msra.mxu0 0.0
      %371 = vmatprep.subr.mxu0 0.0
      %372 = vmatpush1.msra.mxu0 0.0
      %373 = vmatprep.subr.mxu0 0.0
      %374 = vmatpush1.msra.mxu0 0.0
      %375 = vmatprep.subr.mxu0 0.0
      %376 = vmatpush1.msra.mxu0 0.0
      %377 = vmatprep.subr.mxu0 0.0
      %378 = vmatpush1.msra.mxu0 0.0
      %379 = vmatprep.subr.mxu0 0.0
      %380 = vmatpush1.msra.mxu0 0.0
      %381 = vmatprep.subr.mxu0 0.0
      %382 = vmatpush1.msra.mxu0 0.0
      %383 = vmatprep.subr.mxu0 0.0
      %384 = vmatpush1.msra.mxu0 0.0
      %385 = vmatprep.subr.mxu0 0.0
      %386 = vmatpush1.msra.mxu0 0.0
      %387 = vmatprep.subr.mxu0 0.0
      %388 = vmatpush1.msra.mxu0 0.0
      %389 = vmatprep.subr.mxu0 0.0
      %390 = vmatpush1.msra.mxu0 0.0
      %391 = vmatprep.subr.mxu0 0.0
      %392 = vmatpush1.msra.mxu0 0.0
      %393 = vmatprep.subr.mxu0 0.0
      %394 = vmatpush1.msra.mxu0 0.0
      %395 = vmatprep.subr.mxu0 0.0
      %396 = vmatpush1.msra.mxu0 0.0
      %397 = vmatprep.subr.mxu0 0.0
      %398 = vmatpush1.msra.mxu0 0.0
      %399 = vmatprep.subr.mxu0 0.0
      %400 = vmatpush1.msra.mxu0 0.0
      %401 = vmatprep.subr.mxu0 0.0
      %402 = vmatpush1.msra.mxu0 0.0
      %403 = vmatprep.subr.mxu0 0.0
      %404 = vmatpush1.msra.mxu0 0.0
      %405 = vmatprep.subr.mxu0 0.0
      %406 = vmatpush1.msra.mxu0 0.0
      %407 = vmatprep.subr.mxu0 0.0
      %408 = vmatpush1.msra.mxu0 0.0
      %409 = vmatprep.subr.mxu0 0.0
      %410 = vmatpush1.msra.mxu0 0.0
      %411 = vmatprep.subr.mxu0 0.0
      %412 = vmatpush1.msra.mxu0 0.0
      %413 = vmatprep.subr.mxu0 0.0
      %414 = vmatpush1.msra.mxu0 0.0
      %415 = vmatprep.subr.mxu0 0.0
      %416 = vmatpush1.msra.mxu0 0.0
      %417 = vmatprep.subr.mxu0 0.0
      %418 = vmatpush1.msra.mxu0 0.0
      %419 = vmatprep.subr.mxu0 0.0
      %420 = vmatpush1.msra.mxu0 0.0
      %421 = vmatprep.subr.mxu0 0.0
      %422 = vmatpush1.msra.mxu0 0.0
      %423 = vmatprep.subr.mxu0 0.0
      %424 = vmatpush1.msra.mxu0 0.0
      %425 = vmatprep.subr.mxu0 0.0
      %426 = vmatpush1.msra.mxu0 0.0
      %427 = vmatprep.subr.mxu0 0.0
      %428 = vmatpush1.msra.mxu0 0.0
      %429 = vmatprep.subr.mxu0 0.0
      %430 = vmatpush1.msra.mxu0 0.0
      %431 = vmatprep.mubr.f32.mxu0 0.0
      %432 = vmatmul.mubr.f32.gmra.mrb[0].mxu0 %v365
      %v433 = vpop.f32.mrb[0].mxu0
      %v434 = vadd.f32 %v361, %v433
      %v435 = vpop.f32.mrb[0].mxu0
      %436 = vdwg.mxu0
      %437 = vrot.lane.b32.xlu0 %v280, 127
      %v438 = vpop.permute.xlu0 %437
      %vm439 = vcmp.lt.s32.totalorder %v232, 15
      %v440 = vsel %vm439, 1, 0
      %vm441 = vcmp.eq.s32.totalorder %v440, 1
      %v442 = vsel %vm441, %v438, 0.0
      %s443 = scalar_lea.vmem %s1, 16
      %v444 = vld [vmem:[%s443] sm:$0xff]
      %v446 = vsel %vm290, %v444, 0
      %448 = vmatprep.subr.mxu0 0.0
      %449 = vmatpush1.msra.mxu0 %v442
      %450 = vmatprep.subr.mxu0 0.0
      %451 = vmatpush1.msra.mxu0 0.0
      %452 = vmatprep.subr.mxu0 0.0
      %453 = vmatpush1.msra.mxu0 0.0
      %454 = vmatprep.subr.mxu0 0.0
      %455 = vmatpush1.msra.mxu0 0.0
      %456 = vmatprep.subr.mxu0 0.0
      %457 = vmatpush1.msra.mxu0 0.0
      %458 = vmatprep.subr.mxu0 0.0
      %459 = vmatpush1.msra.mxu0 0.0
      %460 = vmatprep.subr.mxu0 0.0
      %461 = vmatpush1.msra.mxu0 0.0
      %462 = vmatprep.subr.mxu0 0.0
      %463 = vmatpush1.msra.mxu0 0.0
      %464 = vmatprep.subr.mxu0 0.0
      %465 = vmatpush1.msra.mxu0 0.0
      %466 = vmatprep.subr.mxu0 0.0
      %467 = vmatpush1.msra.mxu0 0.0
      %468 = vmatprep.subr.mxu0 0.0
      %469 = vmatpush1.msra.mxu0 0.0
      %470 = vmatprep.subr.mxu0 0.0
      %471 = vmatpush1.msra.mxu0 0.0
      %472 = vmatprep.subr.mxu0 0.0
      %473 = vmatpush1.msra.mxu0 0.0
      %474 = vmatprep.subr.mxu0 0.0
      %475 = vmatpush1.msra.mxu0 0.0
      %476 = vmatprep.subr.mxu0 0.0
      %477 = vmatpush1.msra.mxu0 0.0
      %478 = vmatprep.subr.mxu0 0.0
      %479 = vmatpush1.msra.mxu0 0.0
      %480 = vmatprep.subr.mxu0 0.0
      %481 = vmatpush1.msra.mxu0 0.0
      %482 = vmatprep.subr.mxu0 0.0
      %483 = vmatpush1.msra.mxu0 0.0
      %484 = vmatprep.subr.mxu0 0.0
      %485 = vmatpush1.msra.mxu0 0.0
      %486 = vmatprep.subr.mxu0 0.0
      %487 = vmatpush1.msra.mxu0 0.0
      %488 = vmatprep.subr.mxu0 0.0
      %489 = vmatpush1.msra.mxu0 0.0
      %490 = vmatprep.subr.mxu0 0.0
      %491 = vmatpush1.msra.mxu0 0.0
      %492 = vmatprep.subr.mxu0 0.0
      %493 = vmatpush1.msra.mxu0 0.0
      %494 = vmatprep.subr.mxu0 0.0
      %495 = vmatpush1.msra.mxu0 0.0
      %496 = vmatprep.subr.mxu0 0.0
      %497 = vmatpush1.msra.mxu0 0.0
      %498 = vmatprep.subr.mxu0 0.0
      %499 = vmatpush1.msra.mxu0 0.0
      %500 = vmatprep.subr.mxu0 0.0
      %501 = vmatpush1.msra.mxu0 0.0
      %502 = vmatprep.subr.mxu0 0.0
      %503 = vmatpush1.msra.mxu0 0.0
      %504 = vmatprep.subr.mxu0 0.0
      %505 = vmatpush1.msra.mxu0 0.0
      %506 = vmatprep.subr.mxu0 0.0
      %507 = vmatpush1.msra.mxu0 0.0
      %508 = vmatprep.subr.mxu0 0.0
      %509 = vmatpush1.msra.mxu0 0.0
      %510 = vmatprep.subr.mxu0 0.0
      %511 = vmatpush1.msra.mxu0 0.0
      %512 = vmatprep.mubr.f32.mxu0 0.0
      %513 = vmatmul.mubr.f32.gmra.mrb[0].mxu0 %v446
      %v514 = vpop.f32.mrb[0].mxu0
      %v515 = vadd.f32 0.0, %v514
      %v516 = vpop.f32.mrb[0].mxu0
      %517 = vdwg.mxu0
      %v518 = vadd.f32 %v434, %v515
      %v519 = vsel %vm279, %v518, 0.0
      %520 = vst [vmem:[%s226] sm:$0xff] %v519
      %521 = vadd.xlane.f32.xlu0 %v519
      %v522 = vpop.xlane.xlu0 %521
      %v523 = vadd.f32 %v522, 0.0
      %v524 = vmul.f32 %v519, %v519
      %525 = vadd.xlane.f32.xlu0 %v524
      %v526 = vpop.xlane.xlu0 %525
      %v527 = vadd.f32 %v526, 0.0
      %v529 = vlaneseq
      %v530 = vshrl.u32 %v529, 7
      %v531 = vsub.s32 %v232, %v530
      %v532 = vrot.slane %v523, %v531
      %v535 = vlaneseq
      %v536 = vshrl.u32 %v535, 7
      %v537 = vsub.s32 %v232, %v536
      %v538 = vrot.slane %v527, %v537
      %vm540 = vcmask 1040384
      %v541 = vsel %vm540, %v532, %v538
      %vm542 = vcmask 58368
      %543 = vst.msk [vmem:[%s230] sm:$0x3] %vm542, %v541
      %p544 = scmp.lt.s32.totalorder %s17, 1
      %s545 = scalar_select %p544, %s17, 1
      %s546 = smul.addr %s545, 8
      %s547 = scalar_lea.vmem %s4, %s546
      %p548 = scmp.lt.s32.totalorder %s17, 1
      %s549 = scalar_select %p548, %s17, 1
      %s550 = smul.addr %s549, 2
      %s551 = scalar_lea.vmem %s5, %s550
      // Predicated region
      $region37: #{residual_conv_block.4} parent=35 // pred_check
        %p552 = pneg %p124
      $region38: #{residual_conv_block.4} parent=35 // pred_check_branch
        %554 = sbr.rel (%p552) target = $region40
      $region39: #{residual_conv_block.4} parent=35 // pred_region
        _
      $region40: #{residual_conv_block.4} parent=35 // pred_fallthru
        _
      // Predicated region
      $region41: #{residual_conv_block.4} parent=35 // pred_check
        %p555 = pneg %p150
      $region42: #{residual_conv_block.4} parent=35 // pred_check_branch
        %557 = sbr.rel (%p555) target = $region44
      $region43: #{residual_conv_block.4} parent=35 // pred_region
        _
      $region44: #{residual_conv_block.4} parent=35 // pred_fallthru
        _
    $region36: #{residual_conv_block.4} parent=5 // pred_fallthru
      _
    %p558 = scmp.le.s32.totalorder 2, %s12
    // Predicated region
    $region45: #{residual_conv_block.4} parent=5 // pred_check
      %p559 = pneg %p558
    $region46: #{residual_conv_block.4} parent=5 // pred_check_branch
      %561 = sbr.rel (%p559) target = $region48
    $region47: #{residual_conv_block.4} parent=5 // pred_region
      %s562 = ssub.s32 %s12, 2
      // Predicated region
      $region49: #{residual_conv_block.4} parent=47 // pred_check
        %p563 = pneg %p130
      $region50: #{residual_conv_block.4} parent=47 // pred_check_branch
        %565 = sbr.rel (%p563) target = $region52
      $region51: #{residual_conv_block.4} parent=47 // pred_region
        %p566 = scmp.lt.s32.totalorder %s18, 1
        %s567 = scalar_select %p566, %s18, 1
        %s568 = smul.addr %s567, 8
        %s569 = scalar_lea.vmem %s4, %s568
      $region52: #{residual_conv_block.4} parent=47 // pred_fallthru
        _
      // Predicated region
      $region53: #{residual_conv_block.4} parent=47 // pred_check
        %p570 = pneg %p156
      $region54: #{residual_conv_block.4} parent=47 // pred_check_branch
        %572 = sbr.rel (%p570) target = $region56
      $region55: #{residual_conv_block.4} parent=47 // pred_region
        %p573 = scmp.lt.s32.totalorder %s18, 1
        %s574 = scalar_select %p573, %s18, 1
        %s575 = smul.addr %s574, 2
        %s576 = scalar_lea.vmem %s5, %s575
      $region56: #{residual_conv_block.4} parent=47 // pred_fallthru
        _
    $region48: #{residual_conv_block.4} parent=5 // pred_fallthru
      _
  $region6: #{residual_conv_block.4} parent=0 // loop_footer
    %s16 = sadd.s32 1, %s12
  $region7: #{residual_conv_block.4} parent=0 // loop_footer_branch
    %11 = sbr.rel target = $region3
  $region8: #{residual_conv_block.4} parent=0 // loop_exit
    _

</llo_original>
